<compile_context>
chip_gen: v5e
topology: v5e:2x2
jax: 0.10.0
libtpu: 0.0.40
codegen_flags: <defaults>
</compile_context>

<pallas_src>
import jax
import jax.numpy as jnp
from jax import lax
from jax.experimental import pallas as pl
from jax.experimental.pallas import tpu as pltpu


def _fst_kernel(x_ref, wih0_ref, whh0_ref, b0_ref,
                wih1_ref, whh1_ref, b1_ref,
                wh_ref, bh_ref,
                pred_ref,
                xz_ref, hs_ref):
    SB, In = x_ref.shape          # x pre-flattened to (S*B, In) in the wrapper
    S, H = hs_ref.shape
    B = SB // S

    # ---- hoisted layer-0 input projection for ALL timesteps (one MXU pass) ----
    xz_ref[...] = (jnp.dot(x_ref[...], wih0_ref[...],
                           preferred_element_type=jnp.float32)
                   + b0_ref[...])

    # Hoist remaining weight loads above the time loop.
    whh0 = whh0_ref[...]
    wih1 = wih1_ref[...]
    whh1 = whh1_ref[...]
    b1 = b1_ref[...]

    def gates(z, c):
        # PyTorch gate order: i, f, g, o.
        # One full-(B, 4H) sigmoid pass (4H == 128 lanes), slice i/f/o out of
        # it; tanh only on the g slice -> fewer EUP passes per step.
        sg = jax.nn.sigmoid(z)
        i = sg[:, 0 * H:1 * H]
        f = sg[:, 1 * H:2 * H]
        o = sg[:, 3 * H:4 * H]
        g = jnp.tanh(z[:, 2 * H:3 * H])
        c_new = f * c + i * g
        h_new = o * jnp.tanh(c_new)
        return h_new, c_new

    def body(t, carry):
        h0, c0, h1, c1 = carry
        # Layer 0: input contribution precomputed; only the recurrent matmul here.
        row = pl.multiple_of(t * B, B)
        z0 = (xz_ref[pl.ds(row, B), :]
              + jnp.dot(h0, whh0, preferred_element_type=jnp.float32))
        h0, c0 = gates(z0, c0)
        # TODO(synk): nn.LSTM dropout=0.3 between layers is train-only; eval
        # (inference) semantics are implemented here (no dropout).
        # Layer 1: the h1@whh1 term has no dep on this step's h0, so the LLO
        # scheduler can overlap it with the layer-0 gate computation.
        z1 = (jnp.dot(h0, wih1, preferred_element_type=jnp.float32)
              + jnp.dot(h1, whh1, preferred_element_type=jnp.float32)
              + b1)
        h1, c1 = gates(z1, c1)
        # out[:, -1, :] -> layer-1 hidden of the LAST batch element at time t.
        hs_ref[pl.ds(t, 1), :] = h1[B - 1:B, :]
        return h0, c0, h1, c1

    zeros = jnp.zeros((B, H), jnp.float32)
    lax.fori_loop(0, S, body, (zeros, zeros, zeros, zeros), unroll=True)

    # Fused (activation-free) 3-layer head applied once to all timesteps;
    # single batched output store.
    pred_ref[...] = (jnp.dot(hs_ref[...], wh_ref[...],
                             preferred_element_type=jnp.float32)
                     + bh_ref[...])


def fst_model_forward(x, params):
    """x: (S, B, In) float32.  Returns predictions (S, output_size)."""
    S, B, In = x.shape
    H = params["whh0"].shape[0]
    out_size = params["wo"].shape[1]

    # Host-side algebraic fusion of the activation-free 3-layer linear head:
    #   y = ((h @ wr1 + br1) @ wr2 + br2) @ wo + bo == h @ W_head + b_head
    w_head = params["wr1"] @ params["wr2"] @ params["wo"]            # (H, out)
    b_head = (params["br1"] @ params["wr2"] @ params["wo"]
              + params["br2"] @ params["wo"] + params["bo"])         # (1, out)

    # Row-major flatten outside the kernel (metadata-only) so the kernel's
    # hoisted input projection needs no in-kernel relayout.
    x2 = x.reshape(S * B, In)

    vmem = pl.BlockSpec(memory_space=pltpu.MemorySpace.VMEM)
    return pl.pallas_call(
        _fst_kernel,
        out_shape=jax.ShapeDtypeStruct((S, out_size), jnp.float32),
        in_specs=[vmem] * 9,
        out_specs=vmem,
        scratch_shapes=[
            pltpu.VMEM((S * B, 4 * H), jnp.float32),  # hoisted layer-0 input proj
            pltpu.VMEM((S, H), jnp.float32),          # per-timestep last h1 rows
        ],
    )(x2, params["wih0"], params["whh0"], params["b0"],
      params["wih1"], params["whh1"], params["b1"],
      w_head, b_head)


def make_params(key, input_size, hidden_size, output_size):
    """Deterministic synthetic parameters (shapes match nn.LSTM / nn.Linear)."""
    rl1_out = hidden_size // 2
    rl2_out = rl1_out // 2
    ks = jax.random.split(key, 12)
    s = 1.0 / jnp.sqrt(hidden_size)

    def u(k, shape, scale):
        return jax.random.uniform(k, shape, jnp.float32, -scale, scale)

    params = {
        # LSTM layer 0 (weights stored transposed: (in, 4H)); bias = b_ih + b_hh
        "wih0": u(ks[0], (input_size, 4 * hidden_size), s),
        "whh0": u(ks[1], (hidden_size, 4 * hidden_size), s),
        "b0":   u(ks[2], (1, 4 * hidden_size), s),
        # LSTM layer 1
        "wih1": u(ks[3], (hidden_size, 4 * hidden_size), s),
        "whh1": u(ks[4], (hidden_size, 4 * hidden_size), s),
        "b1":   u(ks[5], (1, 4 * hidden_size), s),
        # Linear head (stored transposed: (in, out))
        "wr1": u(ks[6], (hidden_size, rl1_out), 1.0 / jnp.sqrt(hidden_size)),
        "br1": u(ks[7], (1, rl1_out), 1.0 / jnp.sqrt(hidden_size)),
        "wr2": u(ks[8], (rl1_out, rl2_out), 1.0 / jnp.sqrt(rl1_out)),
        "br2": u(ks[9], (1, rl2_out), 1.0 / jnp.sqrt(rl1_out)),
        "wo":  u(ks[10], (rl2_out, output_size), 1.0 / jnp.sqrt(rl2_out)),
        "bo":  u(ks[11], (1, output_size), 1.0 / jnp.sqrt(rl2_out)),
    }
    return params


def fst_model_reference(x, params):
    """Pure-JAX reference of the same forward pass (unfused, for verification)."""
    S, B, In = x.shape
    H = params["whh0"].shape[0]

    def cell(inp, h, c, wih, whh, b):
        z = inp @ wih + h @ whh + b
        i = jax.nn.sigmoid(z[:, 0 * H:1 * H])
        f = jax.nn.sigmoid(z[:, 1 * H:2 * H])
        g = jnp.tanh(z[:, 2 * H:3 * H])
        o = jax.nn.sigmoid(z[:, 3 * H:4 * H])
        c_new = f * c + i * g
        return o * jnp.tanh(c_new), c_new

    def step(carry, x_t):
        h0, c0, h1, c1 = carry
        h0, c0 = cell(x_t, h0, c0, params["wih0"], params["whh0"], params["b0"])
        h1, c1 = cell(h0, h1, c1, params["wih1"], params["whh1"], params["b1"])
        return (h0, c0, h1, c1), h1

    z = jnp.zeros((B, H), jnp.float32)
    _, out = jax.lax.scan(step, (z, z, z, z), x)   # out: (S, B, H)
    last = out[:, -1, :]                           # out[:, -1, :]
    r1 = last @ params["wr1"] + params["br1"]
    r2 = r1 @ params["wr2"] + params["br2"]
    return r2 @ params["wo"] + params["bo"]


if __name__ == "__main__":
    input_size = 4
    window_size = 8        # acts as the batch dimension (batch_first=False)
    hidden_size = 32       # 4H = 128 -> one f32 vreg of gates per 8 batch rows
    output_size = 1
    seq_len = 8

    key = jax.random.PRNGKey(0)
    kx, kp = jax.random.split(key)
    x = jax.random.normal(kx, (seq_len, window_size, input_size), jnp.float32)
    params = make_params(kp, input_size, hidden_size, output_size)

    preds = fst_model_forward(x, params)
    preds = jax.block_until_ready(preds)

    ref = fst_model_reference(x, params)
    assert preds.shape == (seq_len, output_size)
    assert jnp.allclose(preds, ref, atol=1e-5, rtol=1e-4), "mismatch vs reference"

    print("KERNEL_OK")
</pallas_src>

<mosaic_0001>
module attributes {stable_mosaic.version = 11 : i64} {
  func.func @_fst_kernel(%arg0: memref<64x4xf32, #tpu.memory_space<vmem>>, %arg1: memref<4x128xf32, #tpu.memory_space<vmem>>, %arg2: memref<32x128xf32, #tpu.memory_space<vmem>>, %arg3: memref<1x128xf32, #tpu.memory_space<vmem>>, %arg4: memref<32x128xf32, #tpu.memory_space<vmem>>, %arg5: memref<32x128xf32, #tpu.memory_space<vmem>>, %arg6: memref<1x128xf32, #tpu.memory_space<vmem>>, %arg7: memref<32x1xf32, #tpu.memory_space<vmem>>, %arg8: memref<1x1xf32, #tpu.memory_space<vmem>>, %arg9: memref<8x1xf32, #tpu.memory_space<vmem>>, %arg10: memref<64x128xf32, #tpu.memory_space<vmem>>, %arg11: memref<8x32xf32, #tpu.memory_space<vmem>>) attributes {dimension_semantics = [], scalar_prefetch = 0 : i64, scratch_operands = 2 : i64, tpu.core_type = #tpu.core_type<tc>} {
    %c0 = arith.constant 0 : index
    %c0_0 = arith.constant 0 : index
    %0 = vector.load %arg0[%c0, %c0_0] : memref<64x4xf32, #tpu.memory_space<vmem>>, vector<64x4xf32>
    %c0_1 = arith.constant 0 : index
    %c0_2 = arith.constant 0 : index
    %1 = vector.load %arg1[%c0_1, %c0_2] : memref<4x128xf32, #tpu.memory_space<vmem>>, vector<4x128xf32>
    %cst = arith.constant dense<0.000000e+00> : vector<64x128xf32>
    %2 = tpu.matmul %0, %1, %cst {dimension_numbers = #tpu.dot_dimension_numbers<[1], [0], [0], [1], [0, 0, 1, 1], [], []>} : vector<64x4xf32>, vector<4x128xf32>, vector<64x128xf32> -> vector<64x128xf32>
    %c0_3 = arith.constant 0 : index
    %c0_4 = arith.constant 0 : index
    %3 = vector.load %arg3[%c0_3, %c0_4] : memref<1x128xf32, #tpu.memory_space<vmem>>, vector<1x128xf32>
    %4 = vector.broadcast %3 : vector<1x128xf32> to vector<64x128xf32>
    %5 = arith.addf %2, %4 : vector<64x128xf32>
    %c0_5 = arith.constant 0 : index
    %c0_6 = arith.constant 0 : index
    %6 = vector.load %arg10[%c0_5, %c0_6] : memref<64x128xf32, #tpu.memory_space<vmem>>, vector<64x128xf32>
    tpu.vector_store %arg10[%c0_5, %c0_6], %5 {strides = array<i32>} : memref<64x128xf32, #tpu.memory_space<vmem>>, vector<64x128xf32>,
    %c0_7 = arith.constant 0 : index
    %c0_8 = arith.constant 0 : index
    %7 = vector.load %arg2[%c0_7, %c0_8] : memref<32x128xf32, #tpu.memory_space<vmem>>, vector<32x128xf32>
    %c0_9 = arith.constant 0 : index
    %c0_10 = arith.constant 0 : index
    %8 = vector.load %arg4[%c0_9, %c0_10] : memref<32x128xf32, #tpu.memory_space<vmem>>, vector<32x128xf32>
    %c0_11 = arith.constant 0 : index
    %c0_12 = arith.constant 0 : index
    %9 = vector.load %arg5[%c0_11, %c0_12] : memref<32x128xf32, #tpu.memory_space<vmem>>, vector<32x128xf32>
    %c0_13 = arith.constant 0 : index
    %c0_14 = arith.constant 0 : index
    %10 = vector.load %arg6[%c0_13, %c0_14] : memref<1x128xf32, #tpu.memory_space<vmem>>, vector<1x128xf32>
    %cst_15 = arith.constant 0.000000e+00 : f32
    %11 = vector.broadcast %cst_15 : f32 to vector<8x32xf32>
    %c0_i32 = arith.constant 0 : i32
    %c8_i32 = arith.constant 8 : i32
    %12 = arith.muli %c0_i32, %c8_i32 : i32
    %13 = tpu.assume_multiple %12, 8 : i32
    %14 = arith.index_cast %13 : i32 to index
    %c0_16 = arith.constant 0 : index
    %15 = vector.load %arg10[%14, %c0_16] : memref<64x128xf32, #tpu.memory_space<vmem>>, vector<8x128xf32>
    %cst_17 = arith.constant dense<0.000000e+00> : vector<8x128xf32>
    %16 = tpu.matmul %11, %7, %cst_17 {dimension_numbers = #tpu.dot_dimension_numbers<[1], [0], [0], [1], [0, 0, 1, 1], [], []>} : vector<8x32xf32>, vector<32x128xf32>, vector<8x128xf32> -> vector<8x128xf32>
    %17 = arith.addf %15, %16 : vector<8x128xf32>
    %18 = arith.negf %17 : vector<8x128xf32>
    %19 = math.exp %18 : vector<8x128xf32>
    %cst_18 = arith.constant 1.000000e+00 : f32
    %20 = vector.broadcast %cst_18 : f32 to vector<8x128xf32>
    %21 = arith.addf %20, %19 : vector<8x128xf32>
    %22 = arith.divf %20, %21 : vector<8x128xf32>
    %23 = vector.extract_strided_slice %22 {offsets = [0, 0], sizes = [8, 32], strides = [1, 1]} : vector<8x128xf32> to vector<8x32xf32>
    %24 = vector.extract_strided_slice %22 {offsets = [0, 32], sizes = [8, 32], strides = [1, 1]} : vector<8x128xf32> to vector<8x32xf32>
    %25 = vector.extract_strided_slice %22 {offsets = [0, 96], sizes = [8, 32], strides = [1, 1]} : vector<8x128xf32> to vector<8x32xf32>
    %26 = vector.extract_strided_slice %17 {offsets = [0, 64], sizes = [8, 32], strides = [1, 1]} : vector<8x128xf32> to vector<8x32xf32>
    %27 = math.tanh %26 : vector<8x32xf32>
    %28 = arith.mulf %24, %11 : vector<8x32xf32>
    %29 = arith.mulf %23, %27 : vector<8x32xf32>
    %30 = arith.addf %28, %29 : vector<8x32xf32>
    %31 = math.tanh %30 : vector<8x32xf32>
    %32 = arith.mulf %25, %31 : vector<8x32xf32>
    %cst_19 = arith.constant dense<0.000000e+00> : vector<8x128xf32>
    %33 = tpu.matmul %32, %8, %cst_19 {dimension_numbers = #tpu.dot_dimension_numbers<[1], [0], [0], [1], [0, 0, 1, 1], [], []>} : vector<8x32xf32>, vector<32x128xf32>, vector<8x128xf32> -> vector<8x128xf32>
    %cst_20 = arith.constant dense<0.000000e+00> : vector<8x128xf32>
    %34 = tpu.matmul %11, %9, %cst_20 {dimension_numbers = #tpu.dot_dimension_numbers<[1], [0], [0], [1], [0, 0, 1, 1], [], []>} : vector<8x32xf32>, vector<32x128xf32>, vector<8x128xf32> -> vector<8x128xf32>
    %35 = arith.addf %33, %34 : vector<8x128xf32>
    %36 = vector.broadcast %10 : vector<1x128xf32> to vector<8x128xf32>
    %37 = arith.addf %35, %36 : vector<8x128xf32>
    %38 = arith.negf %37 : vector<8x128xf32>
    %39 = math.exp %38 : vector<8x128xf32>
    %cst_21 = arith.constant 1.000000e+00 : f32
    %40 = vector.broadcast %cst_21 : f32 to vector<8x128xf32>
    %41 = arith.addf %40, %39 : vector<8x128xf32>
    %42 = arith.divf %40, %41 : vector<8x128xf32>
    %43 = vector.extract_strided_slice %42 {offsets = [0, 0], sizes = [8, 32], strides = [1, 1]} : vector<8x128xf32> to vector<8x32xf32>
    %44 = vector.extract_strided_slice %42 {offsets = [0, 32], sizes = [8, 32], strides = [1, 1]} : vector<8x128xf32> to vector<8x32xf32>
    %45 = vector.extract_strided_slice %42 {offsets = [0, 96], sizes = [8, 32], strides = [1, 1]} : vector<8x128xf32> to vector<8x32xf32>
    %46 = vector.extract_strided_slice %37 {offsets = [0, 64], sizes = [8, 32], strides = [1, 1]} : vector<8x128xf32> to vector<8x32xf32>
    %47 = math.tanh %46 : vector<8x32xf32>
    %48 = arith.mulf %44, %11 : vector<8x32xf32>
    %49 = arith.mulf %43, %47 : vector<8x32xf32>
    %50 = arith.addf %48, %49 : vector<8x32xf32>
    %51 = math.tanh %50 : vector<8x32xf32>
    %52 = arith.mulf %45, %51 : vector<8x32xf32>
    %53 = vector.extract_strided_slice %52 {offsets = [7, 0], sizes = [1, 32], strides = [1, 1]} : vector<8x32xf32> to vector<1x32xf32>
    %54 = arith.index_cast %c0_i32 : i32 to index
    %c0_22 = arith.constant 0 : index
    %55 = vector.load %arg11[%54, %c0_22] : memref<8x32xf32, #tpu.memory_space<vmem>>, vector<1x32xf32>
    tpu.vector_store %arg11[%54, %c0_22], %53 {strides = array<i32>} : memref<8x32xf32, #tpu.memory_space<vmem>>, vector<1x32xf32>,
    %c1_i32 = arith.constant 1 : i32
    %c8_i32_23 = arith.constant 8 : i32
    %56 = arith.muli %c1_i32, %c8_i32_23 : i32
    %57 = tpu.assume_multiple %56, 8 : i32
    %58 = arith.index_cast %57 : i32 to index
    %c0_24 = arith.constant 0 : index
    %59 = vector.load %arg10[%58, %c0_24] : memref<64x128xf32, #tpu.memory_space<vmem>>, vector<8x128xf32>
    %cst_25 = arith.constant dense<0.000000e+00> : vector<8x128xf32>
    %60 = tpu.matmul %32, %7, %cst_25 {dimension_numbers = #tpu.dot_dimension_numbers<[1], [0], [0], [1], [0, 0, 1, 1], [], []>} : vector<8x32xf32>, vector<32x128xf32>, vector<8x128xf32> -> vector<8x128xf32>
    %61 = arith.addf %59, %60 : vector<8x128xf32>
    %62 = arith.negf %61 : vector<8x128xf32>
    %63 = math.exp %62 : vector<8x128xf32>
    %cst_26 = arith.constant 1.000000e+00 : f32
    %64 = vector.broadcast %cst_26 : f32 to vector<8x128xf32>
    %65 = arith.addf %64, %63 : vector<8x128xf32>
    %66 = arith.divf %64, %65 : vector<8x128xf32>
    %67 = vector.extract_strided_slice %66 {offsets = [0, 0], sizes = [8, 32], strides = [1, 1]} : vector<8x128xf32> to vector<8x32xf32>
    %68 = vector.extract_strided_slice %66 {offsets = [0, 32], sizes = [8, 32], strides = [1, 1]} : vector<8x128xf32> to vector<8x32xf32>
    %69 = vector.extract_strided_slice %66 {offsets = [0, 96], sizes = [8, 32], strides = [1, 1]} : vector<8x128xf32> to vector<8x32xf32>
    %70 = vector.extract_strided_slice %61 {offsets = [0, 64], sizes = [8, 32], strides = [1, 1]} : vector<8x128xf32> to vector<8x32xf32>
    %71 = math.tanh %70 : vector<8x32xf32>
    %72 = arith.mulf %68, %30 : vector<8x32xf32>
    %73 = arith.mulf %67, %71 : vector<8x32xf32>
    %74 = arith.addf %72, %73 : vector<8x32xf32>
    %75 = math.tanh %74 : vector<8x32xf32>
    %76 = arith.mulf %69, %75 : vector<8x32xf32>
    %cst_27 = arith.constant dense<0.000000e+00> : vector<8x128xf32>
    %77 = tpu.matmul %76, %8, %cst_27 {dimension_numbers = #tpu.dot_dimension_numbers<[1], [0], [0], [1], [0, 0, 1, 1], [], []>} : vector<8x32xf32>, vector<32x128xf32>, vector<8x128xf32> -> vector<8x128xf32>
    %cst_28 = arith.constant dense<0.000000e+00> : vector<8x128xf32>
    %78 = tpu.matmul %52, %9, %cst_28 {dimension_numbers = #tpu.dot_dimension_numbers<[1], [0], [0], [1], [0, 0, 1, 1], [], []>} : vector<8x32xf32>, vector<32x128xf32>, vector<8x128xf32> -> vector<8x128xf32>
    %79 = arith.addf %77, %78 : vector<8x128xf32>
    %80 = vector.broadcast %10 : vector<1x128xf32> to vector<8x128xf32>
    %81 = arith.addf %79, %80 : vector<8x128xf32>
    %82 = arith.negf %81 : vector<8x128xf32>
    %83 = math.exp %82 : vector<8x128xf32>
    %cst_29 = arith.constant 1.000000e+00 : f32
    %84 = vector.broadcast %cst_29 : f32 to vector<8x128xf32>
    %85 = arith.addf %84, %83 : vector<8x128xf32>
    %86 = arith.divf %84, %85 : vector<8x128xf32>
    %87 = vector.extract_strided_slice %86 {offsets = [0, 0], sizes = [8, 32], strides = [1, 1]} : vector<8x128xf32> to vector<8x32xf32>
    %88 = vector.extract_strided_slice %86 {offsets = [0, 32], sizes = [8, 32], strides = [1, 1]} : vector<8x128xf32> to vector<8x32xf32>
    %89 = vector.extract_strided_slice %86 {offsets = [0, 96], sizes = [8, 32], strides = [1, 1]} : vector<8x128xf32> to vector<8x32xf32>
    %90 = vector.extract_strided_slice %81 {offsets = [0, 64], sizes = [8, 32], strides = [1, 1]} : vector<8x128xf32> to vector<8x32xf32>
    %91 = math.tanh %90 : vector<8x32xf32>
    %92 = arith.mulf %88, %50 : vector<8x32xf32>
    %93 = arith.mulf %87, %91 : vector<8x32xf32>
    %94 = arith.addf %92, %93 : vector<8x32xf32>
    %95 = math.tanh %94 : vector<8x32xf32>
    %96 = arith.mulf %89, %95 : vector<8x32xf32>
    %97 = vector.extract_strided_slice %96 {offsets = [7, 0], sizes = [1, 32], strides = [1, 1]} : vector<8x32xf32> to vector<1x32xf32>
    %98 = arith.index_cast %c1_i32 : i32 to index
    %c0_30 = arith.constant 0 : index
    %99 = vector.load %arg11[%98, %c0_30] : memref<8x32xf32, #tpu.memory_space<vmem>>, vector<1x32xf32>
    tpu.vector_store %arg11[%98, %c0_30], %97 {strides = array<i32>} : memref<8x32xf32, #tpu.memory_space<vmem>>, vector<1x32xf32>,
    %c2_i32 = arith.constant 2 : i32
    %c8_i32_31 = arith.constant 8 : i32
    %100 = arith.muli %c2_i32, %c8_i32_31 : i32
    %101 = tpu.assume_multiple %100, 8 : i32
    %102 = arith.index_cast %101 : i32 to index
    %c0_32 = arith.constant 0 : index
    %103 = vector.load %arg10[%102, %c0_32] : memref<64x128xf32, #tpu.memory_space<vmem>>, vector<8x128xf32>
    %cst_33 = arith.constant dense<0.000000e+00> : vector<8x128xf32>
    %104 = tpu.matmul %76, %7, %cst_33 {dimension_numbers = #tpu.dot_dimension_numbers<[1], [0], [0], [1], [0, 0, 1, 1], [], []>} : vector<8x32xf32>, vector<32x128xf32>, vector<8x128xf32> -> vector<8x128xf32>
    %105 = arith.addf %103, %104 : vector<8x128xf32>
    %106 = arith.negf %105 : vector<8x128xf32>
    %107 = math.exp %106 : vector<8x128xf32>
    %cst_34 = arith.constant 1.000000e+00 : f32
    %108 = vector.broadcast %cst_34 : f32 to vector<8x128xf32>
    %109 = arith.addf %108, %107 : vector<8x128xf32>
    %110 = arith.divf %108, %109 : vector<8x128xf32>
    %111 = vector.extract_strided_slice %110 {offsets = [0, 0], sizes = [8, 32], strides = [1, 1]} : vector<8x128xf32> to vector<8x32xf32>
    %112 = vector.extract_strided_slice %110 {offsets = [0, 32], sizes = [8, 32], strides = [1, 1]} : vector<8x128xf32> to vector<8x32xf32>
    %113 = vector.extract_strided_slice %110 {offsets = [0, 96], sizes = [8, 32], strides = [1, 1]} : vector<8x128xf32> to vector<8x32xf32>
    %114 = vector.extract_strided_slice %105 {offsets = [0, 64], sizes = [8, 32], strides = [1, 1]} : vector<8x128xf32> to vector<8x32xf32>
    %115 = math.tanh %114 : vector<8x32xf32>
    %116 = arith.mulf %112, %74 : vector<8x32xf32>
    %117 = arith.mulf %111, %115 : vector<8x32xf32>
    %118 = arith.addf %116, %117 : vector<8x32xf32>
    %119 = math.tanh %118 : vector<8x32xf32>
    %120 = arith.mulf %113, %119 : vector<8x32xf32>
    %cst_35 = arith.constant dense<0.000000e+00> : vector<8x128xf32>
    %121 = tpu.matmul %120, %8, %cst_35 {dimension_numbers = #tpu.dot_dimension_numbers<[1], [0], [0], [1], [0, 0, 1, 1], [], []>} : vector<8x32xf32>, vector<32x128xf32>, vector<8x128xf32> -> vector<8x128xf32>
    %cst_36 = arith.constant dense<0.000000e+00> : vector<8x128xf32>
    %122 = tpu.matmul %96, %9, %cst_36 {dimension_numbers = #tpu.dot_dimension_numbers<[1], [0], [0], [1], [0, 0, 1, 1], [], []>} : vector<8x32xf32>, vector<32x128xf32>, vector<8x128xf32> -> vector<8x128xf32>
    %123 = arith.addf %121, %122 : vector<8x128xf32>
    %124 = vector.broadcast %10 : vector<1x128xf32> to vector<8x128xf32>
    %125 = arith.addf %123, %124 : vector<8x128xf32>
    %126 = arith.negf %125 : vector<8x128xf32>
    %127 = math.exp %126 : vector<8x128xf32>
    %cst_37 = arith.constant 1.000000e+00 : f32
    %128 = vector.broadcast %cst_37 : f32 to vector<8x128xf32>
    %129 = arith.addf %128, %127 : vector<8x128xf32>
    %130 = arith.divf %128, %129 : vector<8x128xf32>
    %131 = vector.extract_strided_slice %130 {offsets = [0, 0], sizes = [8, 32], strides = [1, 1]} : vector<8x128xf32> to vector<8x32xf32>
    %132 = vector.extract_strided_slice %130 {offsets = [0, 32], sizes = [8, 32], strides = [1, 1]} : vector<8x128xf32> to vector<8x32xf32>
    %133 = vector.extract_strided_slice %130 {offsets = [0, 96], sizes = [8, 32], strides = [1, 1]} : vector<8x128xf32> to vector<8x32xf32>
    %134 = vector.extract_strided_slice %125 {offsets = [0, 64], sizes = [8, 32], strides = [1, 1]} : vector<8x128xf32> to vector<8x32xf32>
    %135 = math.tanh %134 : vector<8x32xf32>
    %136 = arith.mulf %132, %94 : vector<8x32xf32>
    %137 = arith.mulf %131, %135 : vector<8x32xf32>
    %138 = arith.addf %136, %137 : vector<8x32xf32>
    %139 = math.tanh %138 : vector<8x32xf32>
    %140 = arith.mulf %133, %139 : vector<8x32xf32>
    %141 = vector.extract_strided_slice %140 {offsets = [7, 0], sizes = [1, 32], strides = [1, 1]} : vector<8x32xf32> to vector<1x32xf32>
    %142 = arith.index_cast %c2_i32 : i32 to index
    %c0_38 = arith.constant 0 : index
    %143 = vector.load %arg11[%142, %c0_38] : memref<8x32xf32, #tpu.memory_space<vmem>>, vector<1x32xf32>
    tpu.vector_store %arg11[%142, %c0_38], %141 {strides = array<i32>} : memref<8x32xf32, #tpu.memory_space<vmem>>, vector<1x32xf32>,
    %c3_i32 = arith.constant 3 : i32
    %c8_i32_39 = arith.constant 8 : i32
    %144 = arith.muli %c3_i32, %c8_i32_39 : i32
    %145 = tpu.assume_multiple %144, 8 : i32
    %146 = arith.index_cast %145 : i32 to index
    %c0_40 = arith.constant 0 : index
    %147 = vector.load %arg10[%146, %c0_40] : memref<64x128xf32, #tpu.memory_space<vmem>>, vector<8x128xf32>
    %cst_41 = arith.constant dense<0.000000e+00> : vector<8x128xf32>
    %148 = tpu.matmul %120, %7, %cst_41 {dimension_numbers = #tpu.dot_dimension_numbers<[1], [0], [0], [1], [0, 0, 1, 1], [], []>} : vector<8x32xf32>, vector<32x128xf32>, vector<8x128xf32> -> vector<8x128xf32>
    %149 = arith.addf %147, %148 : vector<8x128xf32>
    %150 = arith.negf %149 : vector<8x128xf32>
    %151 = math.exp %150 : vector<8x128xf32>
    %cst_42 = arith.constant 1.000000e+00 : f32
    %152 = vector.broadcast %cst_42 : f32 to vector<8x128xf32>
    %153 = arith.addf %152, %151 : vector<8x128xf32>
    %154 = arith.divf %152, %153 : vector<8x128xf32>
    %155 = vector.extract_strided_slice %154 {offsets = [0, 0], sizes = [8, 32], strides = [1, 1]} : vector<8x128xf32> to vector<8x32xf32>
    %156 = vector.extract_strided_slice %154 {offsets = [0, 32], sizes = [8, 32], strides = [1, 1]} : vector<8x128xf32> to vector<8x32xf32>
    %157 = vector.extract_strided_slice %154 {offsets = [0, 96], sizes = [8, 32], strides = [1, 1]} : vector<8x128xf32> to vector<8x32xf32>
    %158 = vector.extract_strided_slice %149 {offsets = [0, 64], sizes = [8, 32], strides = [1, 1]} : vector<8x128xf32> to vector<8x32xf32>
    %159 = math.tanh %158 : vector<8x32xf32>
    %160 = arith.mulf %156, %118 : vector<8x32xf32>
    %161 = arith.mulf %155, %159 : vector<8x32xf32>
    %162 = arith.addf %160, %161 : vector<8x32xf32>
    %163 = math.tanh %162 : vector<8x32xf32>
    %164 = arith.mulf %157, %163 : vector<8x32xf32>
    %cst_43 = arith.constant dense<0.000000e+00> : vector<8x128xf32>
    %165 = tpu.matmul %164, %8, %cst_43 {dimension_numbers = #tpu.dot_dimension_numbers<[1], [0], [0], [1], [0, 0, 1, 1], [], []>} : vector<8x32xf32>, vector<32x128xf32>, vector<8x128xf32> -> vector<8x128xf32>
    %cst_44 = arith.constant dense<0.000000e+00> : vector<8x128xf32>
    %166 = tpu.matmul %140, %9, %cst_44 {dimension_numbers = #tpu.dot_dimension_numbers<[1], [0], [0], [1], [0, 0, 1, 1], [], []>} : vector<8x32xf32>, vector<32x128xf32>, vector<8x128xf32> -> vector<8x128xf32>
    %167 = arith.addf %165, %166 : vector<8x128xf32>
    %168 = vector.broadcast %10 : vector<1x128xf32> to vector<8x128xf32>
    %169 = arith.addf %167, %168 : vector<8x128xf32>
    %170 = arith.negf %169 : vector<8x128xf32>
    %171 = math.exp %170 : vector<8x128xf32>
    %cst_45 = arith.constant 1.000000e+00 : f32
    %172 = vector.broadcast %cst_45 : f32 to vector<8x128xf32>
    %173 = arith.addf %172, %171 : vector<8x128xf32>
    %174 = arith.divf %172, %173 : vector<8x128xf32>
    %175 = vector.extract_strided_slice %174 {offsets = [0, 0], sizes = [8, 32], strides = [1, 1]} : vector<8x128xf32> to vector<8x32xf32>
    %176 = vector.extract_strided_slice %174 {offsets = [0, 32], sizes = [8, 32], strides = [1, 1]} : vector<8x128xf32> to vector<8x32xf32>
    %177 = vector.extract_strided_slice %174 {offsets = [0, 96], sizes = [8, 32], strides = [1, 1]} : vector<8x128xf32> to vector<8x32xf32>
    %178 = vector.extract_strided_slice %169 {offsets = [0, 64], sizes = [8, 32], strides = [1, 1]} : vector<8x128xf32> to vector<8x32xf32>
    %179 = math.tanh %178 : vector<8x32xf32>
    %180 = arith.mulf %176, %138 : vector<8x32xf32>
    %181 = arith.mulf %175, %179 : vector<8x32xf32>
    %182 = arith.addf %180, %181 : vector<8x32xf32>
    %183 = math.tanh %182 : vector<8x32xf32>
    %184 = arith.mulf %177, %183 : vector<8x32xf32>
    %185 = vector.extract_strided_slice %184 {offsets = [7, 0], sizes = [1, 32], strides = [1, 1]} : vector<8x32xf32> to vector<1x32xf32>
    %186 = arith.index_cast %c3_i32 : i32 to index
    %c0_46 = arith.constant 0 : index
    %187 = vector.load %arg11[%186, %c0_46] : memref<8x32xf32, #tpu.memory_space<vmem>>, vector<1x32xf32>
    tpu.vector_store %arg11[%186, %c0_46], %185 {strides = array<i32>} : memref<8x32xf32, #tpu.memory_space<vmem>>, vector<1x32xf32>,
    %c4_i32 = arith.constant 4 : i32
    %c8_i32_47 = arith.constant 8 : i32
    %188 = arith.muli %c4_i32, %c8_i32_47 : i32
    %189 = tpu.assume_multiple %188, 8 : i32
    %190 = arith.index_cast %189 : i32 to index
    %c0_48 = arith.constant 0 : index
    %191 = vector.load %arg10[%190, %c0_48] : memref<64x128xf32, #tpu.memory_space<vmem>>, vector<8x128xf32>
    %cst_49 = arith.constant dense<0.000000e+00> : vector<8x128xf32>
    %192 = tpu.matmul %164, %7, %cst_49 {dimension_numbers = #tpu.dot_dimension_numbers<[1], [0], [0], [1], [0, 0, 1, 1], [], []>} : vector<8x32xf32>, vector<32x128xf32>, vector<8x128xf32> -> vector<8x128xf32>
    %193 = arith.addf %191, %192 : vector<8x128xf32>
    %194 = arith.negf %193 : vector<8x128xf32>
    %195 = math.exp %194 : vector<8x128xf32>
    %cst_50 = arith.constant 1.000000e+00 : f32
    %196 = vector.broadcast %cst_50 : f32 to vector<8x128xf32>
    %197 = arith.addf %196, %195 : vector<8x128xf32>
    %198 = arith.divf %196, %197 : vector<8x128xf32>
    %199 = vector.extract_strided_slice %198 {offsets = [0, 0], sizes = [8, 32], strides = [1, 1]} : vector<8x128xf32> to vector<8x32xf32>
    %200 = vector.extract_strided_slice %198 {offsets = [0, 32], sizes = [8, 32], strides = [1, 1]} : vector<8x128xf32> to vector<8x32xf32>
    %201 = vector.extract_strided_slice %198 {offsets = [0, 96], sizes = [8, 32], strides = [1, 1]} : vector<8x128xf32> to vector<8x32xf32>
    %202 = vector.extract_strided_slice %193 {offsets = [0, 64], sizes = [8, 32], strides = [1, 1]} : vector<8x128xf32> to vector<8x32xf32>
    %203 = math.tanh %202 : vector<8x32xf32>
    %204 = arith.mulf %200, %162 : vector<8x32xf32>
    %205 = arith.mulf %199, %203 : vector<8x32xf32>
    %206 = arith.addf %204, %205 : vector<8x32xf32>
    %207 = math.tanh %206 : vector<8x32xf32>
    %208 = arith.mulf %201, %207 : vector<8x32xf32>
    %cst_51 = arith.constant dense<0.000000e+00> : vector<8x128xf32>
    %209 = tpu.matmul %208, %8, %cst_51 {dimension_numbers = #tpu.dot_dimension_numbers<[1], [0], [0], [1], [0, 0, 1, 1], [], []>} : vector<8x32xf32>, vector<32x128xf32>, vector<8x128xf32> -> vector<8x128xf32>
    %cst_52 = arith.constant dense<0.000000e+00> : vector<8x128xf32>
    %210 = tpu.matmul %184, %9, %cst_52 {dimension_numbers = #tpu.dot_dimension_numbers<[1], [0], [0], [1], [0, 0, 1, 1], [], []>} : vector<8x32xf32>, vector<32x128xf32>, vector<8x128xf32> -> vector<8x128xf32>
    %211 = arith.addf %209, %210 : vector<8x128xf32>
    %212 = vector.broadcast %10 : vector<1x128xf32> to vector<8x128xf32>
    %213 = arith.addf %211, %212 : vector<8x128xf32>
    %214 = arith.negf %213 : vector<8x128xf32>
    %215 = math.exp %214 : vector<8x128xf32>
    %cst_53 = arith.constant 1.000000e+00 : f32
    %216 = vector.broadcast %cst_53 : f32 to vector<8x128xf32>
    %217 = arith.addf %216, %215 : vector<8x128xf32>
    %218 = arith.divf %216, %217 : vector<8x128xf32>
    %219 = vector.extract_strided_slice %218 {offsets = [0, 0], sizes = [8, 32], strides = [1, 1]} : vector<8x128xf32> to vector<8x32xf32>
    %220 = vector.extract_strided_slice %218 {offsets = [0, 32], sizes = [8, 32], strides = [1, 1]} : vector<8x128xf32> to vector<8x32xf32>
    %221 = vector.extract_strided_slice %218 {offsets = [0, 96], sizes = [8, 32], strides = [1, 1]} : vector<8x128xf32> to vector<8x32xf32>
    %222 = vector.extract_strided_slice %213 {offsets = [0, 64], sizes = [8, 32], strides = [1, 1]} : vector<8x128xf32> to vector<8x32xf32>
    %223 = math.tanh %222 : vector<8x32xf32>
    %224 = arith.mulf %220, %182 : vector<8x32xf32>
    %225 = arith.mulf %219, %223 : vector<8x32xf32>
    %226 = arith.addf %224, %225 : vector<8x32xf32>
    %227 = math.tanh %226 : vector<8x32xf32>
    %228 = arith.mulf %221, %227 : vector<8x32xf32>
    %229 = vector.extract_strided_slice %228 {offsets = [7, 0], sizes = [1, 32], strides = [1, 1]} : vector<8x32xf32> to vector<1x32xf32>
    %230 = arith.index_cast %c4_i32 : i32 to index
    %c0_54 = arith.constant 0 : index
    %231 = vector.load %arg11[%230, %c0_54] : memref<8x32xf32, #tpu.memory_space<vmem>>, vector<1x32xf32>
    tpu.vector_store %arg11[%230, %c0_54], %229 {strides = array<i32>} : memref<8x32xf32, #tpu.memory_space<vmem>>, vector<1x32xf32>,
    %c5_i32 = arith.constant 5 : i32
    %c8_i32_55 = arith.constant 8 : i32
    %232 = arith.muli %c5_i32, %c8_i32_55 : i32
    %233 = tpu.assume_multiple %232, 8 : i32
    %234 = arith.index_cast %233 : i32 to index
    %c0_56 = arith.constant 0 : index
    %235 = vector.load %arg10[%234, %c0_56] : memref<64x128xf32, #tpu.memory_space<vmem>>, vector<8x128xf32>
    %cst_57 = arith.constant dense<0.000000e+00> : vector<8x128xf32>
    %236 = tpu.matmul %208, %7, %cst_57 {dimension_numbers = #tpu.dot_dimension_numbers<[1], [0], [0], [1], [0, 0, 1, 1], [], []>} : vector<8x32xf32>, vector<32x128xf32>, vector<8x128xf32> -> vector<8x128xf32>
    %237 = arith.addf %235, %236 : vector<8x128xf32>
    %238 = arith.negf %237 : vector<8x128xf32>
    %239 = math.exp %238 : vector<8x128xf32>
    %cst_58 = arith.constant 1.000000e+00 : f32
    %240 = vector.broadcast %cst_58 : f32 to vector<8x128xf32>
    %241 = arith.addf %240, %239 : vector<8x128xf32>
    %242 = arith.divf %240, %241 : vector<8x128xf32>
    %243 = vector.extract_strided_slice %242 {offsets = [0, 0], sizes = [8, 32], strides = [1, 1]} : vector<8x128xf32> to vector<8x32xf32>
    %244 = vector.extract_strided_slice %242 {offsets = [0, 32], sizes = [8, 32], strides = [1, 1]} : vector<8x128xf32> to vector<8x32xf32>
    %245 = vector.extract_strided_slice %242 {offsets = [0, 96], sizes = [8, 32], strides = [1, 1]} : vector<8x128xf32> to vector<8x32xf32>
    %246 = vector.extract_strided_slice %237 {offsets = [0, 64], sizes = [8, 32], strides = [1, 1]} : vector<8x128xf32> to vector<8x32xf32>
    %247 = math.tanh %246 : vector<8x32xf32>
    %248 = arith.mulf %244, %206 : vector<8x32xf32>
    %249 = arith.mulf %243, %247 : vector<8x32xf32>
    %250 = arith.addf %248, %249 : vector<8x32xf32>
    %251 = math.tanh %250 : vector<8x32xf32>
    %252 = arith.mulf %245, %251 : vector<8x32xf32>
    %cst_59 = arith.constant dense<0.000000e+00> : vector<8x128xf32>
    %253 = tpu.matmul %252, %8, %cst_59 {dimension_numbers = #tpu.dot_dimension_numbers<[1], [0], [0], [1], [0, 0, 1, 1], [], []>} : vector<8x32xf32>, vector<32x128xf32>, vector<8x128xf32> -> vector<8x128xf32>
    %cst_60 = arith.constant dense<0.000000e+00> : vector<8x128xf32>
    %254 = tpu.matmul %228, %9, %cst_60 {dimension_numbers = #tpu.dot_dimension_numbers<[1], [0], [0], [1], [0, 0, 1, 1], [], []>} : vector<8x32xf32>, vector<32x128xf32>, vector<8x128xf32> -> vector<8x128xf32>
    %255 = arith.addf %253, %254 : vector<8x128xf32>
    %256 = vector.broadcast %10 : vector<1x128xf32> to vector<8x128xf32>
    %257 = arith.addf %255, %256 : vector<8x128xf32>
    %258 = arith.negf %257 : vector<8x128xf32>
    %259 = math.exp %258 : vector<8x128xf32>
    %cst_61 = arith.constant 1.000000e+00 : f32
    %260 = vector.broadcast %cst_61 : f32 to vector<8x128xf32>
    %261 = arith.addf %260, %259 : vector<8x128xf32>
    %262 = arith.divf %260, %261 : vector<8x128xf32>
    %263 = vector.extract_strided_slice %262 {offsets = [0, 0], sizes = [8, 32], strides = [1, 1]} : vector<8x128xf32> to vector<8x32xf32>
    %264 = vector.extract_strided_slice %262 {offsets = [0, 32], sizes = [8, 32], strides = [1, 1]} : vector<8x128xf32> to vector<8x32xf32>
    %265 = vector.extract_strided_slice %262 {offsets = [0, 96], sizes = [8, 32], strides = [1, 1]} : vector<8x128xf32> to vector<8x32xf32>
    %266 = vector.extract_strided_slice %257 {offsets = [0, 64], sizes = [8, 32], strides = [1, 1]} : vector<8x128xf32> to vector<8x32xf32>
    %267 = math.tanh %266 : vector<8x32xf32>
    %268 = arith.mulf %264, %226 : vector<8x32xf32>
    %269 = arith.mulf %263, %267 : vector<8x32xf32>
    %270 = arith.addf %268, %269 : vector<8x32xf32>
    %271 = math.tanh %270 : vector<8x32xf32>
    %272 = arith.mulf %265, %271 : vector<8x32xf32>
    %273 = vector.extract_strided_slice %272 {offsets = [7, 0], sizes = [1, 32], strides = [1, 1]} : vector<8x32xf32> to vector<1x32xf32>
    %274 = arith.index_cast %c5_i32 : i32 to index
    %c0_62 = arith.constant 0 : index
    %275 = vector.load %arg11[%274, %c0_62] : memref<8x32xf32, #tpu.memory_space<vmem>>, vector<1x32xf32>
    tpu.vector_store %arg11[%274, %c0_62], %273 {strides = array<i32>} : memref<8x32xf32, #tpu.memory_space<vmem>>, vector<1x32xf32>,
    %c6_i32 = arith.constant 6 : i32
    %c8_i32_63 = arith.constant 8 : i32
    %276 = arith.muli %c6_i32, %c8_i32_63 : i32
    %277 = tpu.assume_multiple %276, 8 : i32
    %278 = arith.index_cast %277 : i32 to index
    %c0_64 = arith.constant 0 : index
    %279 = vector.load %arg10[%278, %c0_64] : memref<64x128xf32, #tpu.memory_space<vmem>>, vector<8x128xf32>
    %cst_65 = arith.constant dense<0.000000e+00> : vector<8x128xf32>
    %280 = tpu.matmul %252, %7, %cst_65 {dimension_numbers = #tpu.dot_dimension_numbers<[1], [0], [0], [1], [0, 0, 1, 1], [], []>} : vector<8x32xf32>, vector<32x128xf32>, vector<8x128xf32> -> vector<8x128xf32>
    %281 = arith.addf %279, %280 : vector<8x128xf32>
    %282 = arith.negf %281 : vector<8x128xf32>
    %283 = math.exp %282 : vector<8x128xf32>
    %cst_66 = arith.constant 1.000000e+00 : f32
    %284 = vector.broadcast %cst_66 : f32 to vector<8x128xf32>
    %285 = arith.addf %284, %283 : vector<8x128xf32>
    %286 = arith.divf %284, %285 : vector<8x128xf32>
    %287 = vector.extract_strided_slice %286 {offsets = [0, 0], sizes = [8, 32], strides = [1, 1]} : vector<8x128xf32> to vector<8x32xf32>
    %288 = vector.extract_strided_slice %286 {offsets = [0, 32], sizes = [8, 32], strides = [1, 1]} : vector<8x128xf32> to vector<8x32xf32>
    %289 = vector.extract_strided_slice %286 {offsets = [0, 96], sizes = [8, 32], strides = [1, 1]} : vector<8x128xf32> to vector<8x32xf32>
    %290 = vector.extract_strided_slice %281 {offsets = [0, 64], sizes = [8, 32], strides = [1, 1]} : vector<8x128xf32> to vector<8x32xf32>
    %291 = math.tanh %290 : vector<8x32xf32>
    %292 = arith.mulf %288, %250 : vector<8x32xf32>
    %293 = arith.mulf %287, %291 : vector<8x32xf32>
    %294 = arith.addf %292, %293 : vector<8x32xf32>
    %295 = math.tanh %294 : vector<8x32xf32>
    %296 = arith.mulf %289, %295 : vector<8x32xf32>
    %cst_67 = arith.constant dense<0.000000e+00> : vector<8x128xf32>
    %297 = tpu.matmul %296, %8, %cst_67 {dimension_numbers = #tpu.dot_dimension_numbers<[1], [0], [0], [1], [0, 0, 1, 1], [], []>} : vector<8x32xf32>, vector<32x128xf32>, vector<8x128xf32> -> vector<8x128xf32>
    %cst_68 = arith.constant dense<0.000000e+00> : vector<8x128xf32>
    %298 = tpu.matmul %272, %9, %cst_68 {dimension_numbers = #tpu.dot_dimension_numbers<[1], [0], [0], [1], [0, 0, 1, 1], [], []>} : vector<8x32xf32>, vector<32x128xf32>, vector<8x128xf32> -> vector<8x128xf32>
    %299 = arith.addf %297, %298 : vector<8x128xf32>
    %300 = vector.broadcast %10 : vector<1x128xf32> to vector<8x128xf32>
    %301 = arith.addf %299, %300 : vector<8x128xf32>
    %302 = arith.negf %301 : vector<8x128xf32>
    %303 = math.exp %302 : vector<8x128xf32>
    %cst_69 = arith.constant 1.000000e+00 : f32
    %304 = vector.broadcast %cst_69 : f32 to vector<8x128xf32>
    %305 = arith.addf %304, %303 : vector<8x128xf32>
    %306 = arith.divf %304, %305 : vector<8x128xf32>
    %307 = vector.extract_strided_slice %306 {offsets = [0, 0], sizes = [8, 32], strides = [1, 1]} : vector<8x128xf32> to vector<8x32xf32>
    %308 = vector.extract_strided_slice %306 {offsets = [0, 32], sizes = [8, 32], strides = [1, 1]} : vector<8x128xf32> to vector<8x32xf32>
    %309 = vector.extract_strided_slice %306 {offsets = [0, 96], sizes = [8, 32], strides = [1, 1]} : vector<8x128xf32> to vector<8x32xf32>
    %310 = vector.extract_strided_slice %301 {offsets = [0, 64], sizes = [8, 32], strides = [1, 1]} : vector<8x128xf32> to vector<8x32xf32>
    %311 = math.tanh %310 : vector<8x32xf32>
    %312 = arith.mulf %308, %270 : vector<8x32xf32>
    %313 = arith.mulf %307, %311 : vector<8x32xf32>
    %314 = arith.addf %312, %313 : vector<8x32xf32>
    %315 = math.tanh %314 : vector<8x32xf32>
    %316 = arith.mulf %309, %315 : vector<8x32xf32>
    %317 = vector.extract_strided_slice %316 {offsets = [7, 0], sizes = [1, 32], strides = [1, 1]} : vector<8x32xf32> to vector<1x32xf32>
    %318 = arith.index_cast %c6_i32 : i32 to index
    %c0_70 = arith.constant 0 : index
    %319 = vector.load %arg11[%318, %c0_70] : memref<8x32xf32, #tpu.memory_space<vmem>>, vector<1x32xf32>
    tpu.vector_store %arg11[%318, %c0_70], %317 {strides = array<i32>} : memref<8x32xf32, #tpu.memory_space<vmem>>, vector<1x32xf32>,
    %c7_i32 = arith.constant 7 : i32
    %c8_i32_71 = arith.constant 8 : i32
    %320 = arith.muli %c7_i32, %c8_i32_71 : i32
    %321 = tpu.assume_multiple %320, 8 : i32
    %322 = arith.index_cast %321 : i32 to index
    %c0_72 = arith.constant 0 : index
    %323 = vector.load %arg10[%322, %c0_72] : memref<64x128xf32, #tpu.memory_space<vmem>>, vector<8x128xf32>
    %cst_73 = arith.constant dense<0.000000e+00> : vector<8x128xf32>
    %324 = tpu.matmul %296, %7, %cst_73 {dimension_numbers = #tpu.dot_dimension_numbers<[1], [0], [0], [1], [0, 0, 1, 1], [], []>} : vector<8x32xf32>, vector<32x128xf32>, vector<8x128xf32> -> vector<8x128xf32>
    %325 = arith.addf %323, %324 : vector<8x128xf32>
    %326 = arith.negf %325 : vector<8x128xf32>
    %327 = math.exp %326 : vector<8x128xf32>
    %cst_74 = arith.constant 1.000000e+00 : f32
    %328 = vector.broadcast %cst_74 : f32 to vector<8x128xf32>
    %329 = arith.addf %328, %327 : vector<8x128xf32>
    %330 = arith.divf %328, %329 : vector<8x128xf32>
    %331 = vector.extract_strided_slice %330 {offsets = [0, 0], sizes = [8, 32], strides = [1, 1]} : vector<8x128xf32> to vector<8x32xf32>
    %332 = vector.extract_strided_slice %330 {offsets = [0, 32], sizes = [8, 32], strides = [1, 1]} : vector<8x128xf32> to vector<8x32xf32>
    %333 = vector.extract_strided_slice %330 {offsets = [0, 96], sizes = [8, 32], strides = [1, 1]} : vector<8x128xf32> to vector<8x32xf32>
    %334 = vector.extract_strided_slice %325 {offsets = [0, 64], sizes = [8, 32], strides = [1, 1]} : vector<8x128xf32> to vector<8x32xf32>
    %335 = math.tanh %334 : vector<8x32xf32>
    %336 = arith.mulf %332, %294 : vector<8x32xf32>
    %337 = arith.mulf %331, %335 : vector<8x32xf32>
    %338 = arith.addf %336, %337 : vector<8x32xf32>
    %339 = math.tanh %338 : vector<8x32xf32>
    %340 = arith.mulf %333, %339 : vector<8x32xf32>
    %cst_75 = arith.constant dense<0.000000e+00> : vector<8x128xf32>
    %341 = tpu.matmul %340, %8, %cst_75 {dimension_numbers = #tpu.dot_dimension_numbers<[1], [0], [0], [1], [0, 0, 1, 1], [], []>} : vector<8x32xf32>, vector<32x128xf32>, vector<8x128xf32> -> vector<8x128xf32>
    %cst_76 = arith.constant dense<0.000000e+00> : vector<8x128xf32>
    %342 = tpu.matmul %316, %9, %cst_76 {dimension_numbers = #tpu.dot_dimension_numbers<[1], [0], [0], [1], [0, 0, 1, 1], [], []>} : vector<8x32xf32>, vector<32x128xf32>, vector<8x128xf32> -> vector<8x128xf32>
    %343 = arith.addf %341, %342 : vector<8x128xf32>
    %344 = vector.broadcast %10 : vector<1x128xf32> to vector<8x128xf32>
    %345 = arith.addf %343, %344 : vector<8x128xf32>
    %346 = arith.negf %345 : vector<8x128xf32>
    %347 = math.exp %346 : vector<8x128xf32>
    %cst_77 = arith.constant 1.000000e+00 : f32
    %348 = vector.broadcast %cst_77 : f32 to vector<8x128xf32>
    %349 = arith.addf %348, %347 : vector<8x128xf32>
    %350 = arith.divf %348, %349 : vector<8x128xf32>
    %351 = vector.extract_strided_slice %350 {offsets = [0, 0], sizes = [8, 32], strides = [1, 1]} : vector<8x128xf32> to vector<8x32xf32>
    %352 = vector.extract_strided_slice %350 {offsets = [0, 32], sizes = [8, 32], strides = [1, 1]} : vector<8x128xf32> to vector<8x32xf32>
    %353 = vector.extract_strided_slice %350 {offsets = [0, 96], sizes = [8, 32], strides = [1, 1]} : vector<8x128xf32> to vector<8x32xf32>
    %354 = vector.extract_strided_slice %345 {offsets = [0, 64], sizes = [8, 32], strides = [1, 1]} : vector<8x128xf32> to vector<8x32xf32>
    %355 = math.tanh %354 : vector<8x32xf32>
    %356 = arith.mulf %352, %314 : vector<8x32xf32>
    %357 = arith.mulf %351, %355 : vector<8x32xf32>
    %358 = arith.addf %356, %357 : vector<8x32xf32>
    %359 = math.tanh %358 : vector<8x32xf32>
    %360 = arith.mulf %353, %359 : vector<8x32xf32>
    %361 = vector.extract_strided_slice %360 {offsets = [7, 0], sizes = [1, 32], strides = [1, 1]} : vector<8x32xf32> to vector<1x32xf32>
    %362 = arith.index_cast %c7_i32 : i32 to index
    %c0_78 = arith.constant 0 : index
    %363 = vector.load %arg11[%362, %c0_78] : memref<8x32xf32, #tpu.memory_space<vmem>>, vector<1x32xf32>
    tpu.vector_store %arg11[%362, %c0_78], %361 {strides = array<i32>} : memref<8x32xf32, #tpu.memory_space<vmem>>, vector<1x32xf32>,
    %c8_i32_79 = arith.constant 8 : i32
    %c0_80 = arith.constant 0 : index
    %c0_81 = arith.constant 0 : index
    %364 = vector.load %arg11[%c0_80, %c0_81] : memref<8x32xf32, #tpu.memory_space<vmem>>, vector<8x32xf32>
    %c0_82 = arith.constant 0 : index
    %c0_83 = arith.constant 0 : index
    %365 = vector.load %arg7[%c0_82, %c0_83] : memref<32x1xf32, #tpu.memory_space<vmem>>, vector<32x1xf32>
    %cst_84 = arith.constant dense<0.000000e+00> : vector<8x1xf32>
    %366 = tpu.matmul %364, %365, %cst_84 {dimension_numbers = #tpu.dot_dimension_numbers<[1], [0], [0], [1], [0, 0, 1, 1], [], []>} : vector<8x32xf32>, vector<32x1xf32>, vector<8x1xf32> -> vector<8x1xf32>
    %c0_85 = arith.constant 0 : index
    %c0_86 = arith.constant 0 : index
    %367 = vector.load %arg8[%c0_85, %c0_86] : memref<1x1xf32, #tpu.memory_space<vmem>>, vector<1x1xf32>
    %368 = vector.broadcast %367 : vector<1x1xf32> to vector<8x1xf32>
    %369 = arith.addf %366, %368 : vector<8x1xf32>
    %c0_87 = arith.constant 0 : index
    %c0_88 = arith.constant 0 : index
    %370 = vector.load %arg9[%c0_87, %c0_88] : memref<8x1xf32, #tpu.memory_space<vmem>>, vector<8x1xf32>
    tpu.vector_store %arg9[%c0_87, %c0_88], %369 {strides = array<i32>} : memref<8x1xf32, #tpu.memory_space<vmem>>, vector<8x1xf32>,
    return
  }
}

</mosaic_0001>

<llo_original>
// kernel: tpu_custom_call.1
$region0: #{tpu_custom_call.1}
  #allocation0 [shape = 'u32[]', space=smem, size = 0x4, offset = 0x4, fixed_abs, tag = 'smem constant byte address 0x4 - core index']
  #allocation1 [shape = 'u32[72,128]{1,0:T(1,128)}', space=vmem, size = 0x9000, scoped, tag = 'internal scratch']
  #allocation2 [shape = 'f32[64,128]{1,0:T(8,128)}', space=vmem, size = 0x8000, scoped, tag = 'scratch operand']
  #allocation3 [shape = 'f32[8,32]{1,0:T(8,128)}', space=vmem, size = 0x1000, scoped, tag = 'scratch operand']
  #allocation4 [shape = 'f32[1,1]{1,0:T(1,128)S(1)}', space=vmem, size = 0x200, scoped, tag = 'scoped memory for tpu_custom_call.1']
  %s0 = inlined_call_operand.vmem [shape: f32[64,4], index: 0, kind: input, shape index: {}]
  %s1 = inlined_call_operand.hbm [shape: f32[4,128], index: 1, kind: input, shape index: {}]
  %s2 = inlined_call_operand.vmem [shape: f32[32,128], index: 2, kind: input, shape index: {}]
  %s3 = inlined_call_operand.vmem [shape: f32[1,128], index: 3, kind: input, shape index: {}]
  %s4 = inlined_call_operand.vmem [shape: f32[32,128], index: 4, kind: input, shape index: {}]
  %s5 = inlined_call_operand.vmem [shape: f32[32,128], index: 5, kind: input, shape index: {}]
  %s6 = inlined_call_operand.vmem [shape: f32[1,128], index: 6, kind: input, shape index: {}]
  %s7 = inlined_call_operand.vmem [shape: f32[32,1], index: 7, kind: input, shape index: {}]
  %s8 = inlined_call_operand.<no memory space> [shape: f32[1,1], index: 8, kind: input, shape index: {}]
  %s9 = inlined_call_operand.vmem [shape: f32[8,1], index: 9, kind: output, shape index: {}]
  %s10 = sld [smem:[#allocation0]]
  $region50: #{tpu_custom_call.1} parent=0
    _
  %s12 = ssub.s32 1, %s10
  %s13 = scalar_select 0, %s12, %s10
  %v14 = vstv %s8
  %15 = vst [vmem:[#allocation4] sm:$0x1] %v14
  $region1: #{tpu_custom_call.1} parent=0
    #allocation5 [shape = 'u8[2048]{0}', space=vmem, size = 0x800, scoped, tag = 'input window, operand 1, single buffered']
    #allocation6 [shape = 's32[1]{0}', space=sflag, size = 0x4, scoped, tag = 'scoped memory for tpu_custom_call.1']
    %16 = vsyncpa [#allocation6], 0
    // Predicated region
    $region2: #{tpu_custom_call.1} parent=1 // pred_check
      _
    $region3: #{tpu_custom_call.1} parent=1 // pred_check_branch
      %18 = sbr.rel (0) target = $region5
    $region4: #{tpu_custom_call.1} parent=1 // pred_region
      _
    $region5: #{tpu_custom_call.1} parent=1 // pred_fallthru
      _
    // Predicated region
    $region6: #{tpu_custom_call.1} parent=1 // pred_check
      _
    $region7: #{tpu_custom_call.1} parent=1 // pred_check_branch
      %20 = sbr.rel (0) target = $region9
    $region8: #{tpu_custom_call.1} parent=1 // pred_region
      %22 = vsyncadd [#allocation6], 0
      %s24 = sshll.u32 %s1, 4
      %s25 = int_to_ptr.hbm [resolvable:$true] %s24
      %s26 = sshll.u32 [#allocation5], 4
      %s27 = int_to_ptr.vmem [resolvable:$true] %s26
      %29 = dma.hbm_to_vmem [thread:$0]  %s25, 64, %s27, [#allocation6]
    $region9: #{tpu_custom_call.1} parent=1 // pred_fallthru
      _
    // Predicated region
    $region10: #{tpu_custom_call.1} parent=1 // pred_check
      _
    $region11: #{tpu_custom_call.1} parent=1 // pred_check_branch
      %31 = sbr.rel (0) target = $region13
    $region12: #{tpu_custom_call.1} parent=1 // pred_region
      _
    $region13: #{tpu_custom_call.1} parent=1 // pred_fallthru
      _
    // Predicated region
    $region14: #{tpu_custom_call.1} parent=1 // pred_check
      _
    $region15: #{tpu_custom_call.1} parent=1 // pred_check_branch
      %33 = sbr.rel (0) target = $region17
    $region16: #{tpu_custom_call.1} parent=1 // pred_region
      _
    $region17: #{tpu_custom_call.1} parent=1 // pred_fallthru
      _
    // Predicated region
    $region18: #{tpu_custom_call.1} parent=1 // pred_check
      _
    $region19: #{tpu_custom_call.1} parent=1 // pred_check_branch
      %35 = sbr.rel (0) target = $region21
    $region20: #{tpu_custom_call.1} parent=1 // pred_region
      _
    $region21: #{tpu_custom_call.1} parent=1 // pred_fallthru
      _
    // Predicated region
    $region22: #{tpu_custom_call.1} parent=1 // pred_check
      _
    $region23: #{tpu_custom_call.1} parent=1 // pred_check_branch
      %37 = sbr.rel (0) target = $region25
    $region24: #{tpu_custom_call.1} parent=1 // pred_region
      _
    $region25: #{tpu_custom_call.1} parent=1 // pred_fallthru
      _
    // Predicated region
    $region26: #{tpu_custom_call.1} parent=1 // pred_check
      _
    $region27: #{tpu_custom_call.1} parent=1 // pred_check_branch
      %39 = sbr.rel (0) target = $region29
    $region28: #{tpu_custom_call.1} parent=1 // pred_region
      _
    $region29: #{tpu_custom_call.1} parent=1 // pred_fallthru
      _
    // Predicated region
    $region30: #{tpu_custom_call.1} parent=1 // pred_check
      _
    $region31: #{tpu_custom_call.1} parent=1 // pred_check_branch
      %41 = sbr.rel (0) target = $region33
    $region32: #{tpu_custom_call.1} parent=1 // pred_region
      _
    $region33: #{tpu_custom_call.1} parent=1 // pred_fallthru
      _
    // Predicated region
    $region34: #{tpu_custom_call.1} parent=1 // pred_check
      _
    $region35: #{tpu_custom_call.1} parent=1 // pred_check_branch
      %43 = sbr.rel (0) target = $region37
    $region36: #{tpu_custom_call.1} parent=1 // pred_region
      _
    $region37: #{tpu_custom_call.1} parent=1 // pred_fallthru
      _
    // Predicated region
    $region38: #{tpu_custom_call.1} parent=1 // pred_check
      _
    $region39: #{tpu_custom_call.1} parent=1 // pred_check_branch
      %45 = sbr.rel (0) target = $region41
    $region40: #{tpu_custom_call.1} parent=1 // pred_region
      %47 = dma.done [#allocation6], 64
    $region41: #{tpu_custom_call.1} parent=1 // pred_fallthru
      _
    %v48 = vld [vmem:[%s0] sm:$0xff]
    %v49 = vld [vmem:[%s0 + $0x8] sm:$0xff]
    %v50 = vld [vmem:[%s0 + $0x10] sm:$0xff]
    %v51 = vld [vmem:[%s0 + $0x18] sm:$0xff]
    %v52 = vld [vmem:[%s0 + $0x20] sm:$0xff]
    %v53 = vld [vmem:[%s0 + $0x28] sm:$0xff]
    %v54 = vld [vmem:[%s0 + $0x30] sm:$0xff]
    %v55 = vld [vmem:[%s0 + $0x38] sm:$0xff]
    %v56 = vld [vmem:[#allocation5] sm:$0xf]
    %v57 = vld [vmem:[%s3] sm:$0x1]
    %v59 = vperm.slane %v57, 0
    %vm61 = vcmask 31744
    %v63 = vsel %vm61, %v48, 0
    %v66 = vsel %vm61, %v49, 0
    %v69 = vsel %vm61, %v50, 0
    %v72 = vsel %vm61, %v51, 0
    %v75 = vsel %vm61, %v52, 0
    %v78 = vsel %vm61, %v53, 0
    %v81 = vsel %vm61, %v54, 0
    %v84 = vsel %vm61, %v55, 0
    %vm86 = vcmask 1043456
    %v88 = vsel %vm86, %v56, 0
    %90 = vmatpush.msra.mxu0 0.0
    %91 = vmatpush.msra.mxu0 0.0
    %92 = vmatpush.msra.mxu0 0.0
    %93 = vmatpush.msra.mxu0 0.0
    %94 = vmatpush.msra.mxu0 0.0
    %95 = vmatpush.msra.mxu0 0.0
    %96 = vmatpush.msra.mxu0 0.0
    %97 = vmatpush.msra.mxu0 0.0
    %98 = vmatpush.msra.mxu0 0.0
    %99 = vmatpush.msra.mxu0 0.0
    %100 = vmatpush.msra.mxu0 0.0
    %101 = vmatpush.msra.mxu0 0.0
    %102 = vmatpush.msra.mxu0 0.0
    %103 = vmatpush.msra.mxu0 0.0
    %104 = vmatpush.msra.mxu0 0.0
    %105 = vmatpush.msra.mxu0 %v88
    %106 = vmatmul.f32.gmra.mxu0 %v63
    %v107 = vpop.f32.mrf.mxu0
    %v108 = vadd.f32 %v59, %v107
    %109 = vmatmul.f32.gmra.mxu0 %v66
    %v110 = vpop.f32.mrf.mxu0
    %v111 = vadd.f32 %v59, %v110
    %112 = vmatmul.f32.gmra.mxu0 %v69
    %v113 = vpop.f32.mrf.mxu0
    %v114 = vadd.f32 %v59, %v113
    %115 = vmatmul.f32.gmra.mxu0 %v72
    %v116 = vpop.f32.mrf.mxu0
    %v117 = vadd.f32 %v59, %v116
    %118 = vmatmul.f32.gmra.mxu0 %v75
    %v119 = vpop.f32.mrf.mxu0
    %v120 = vadd.f32 %v59, %v119
    %121 = vmatmul.f32.gmra.mxu0 %v78
    %v122 = vpop.f32.mrf.mxu0
    %v123 = vadd.f32 %v59, %v122
    %124 = vmatmul.f32.gmra.mxu0 %v81
    %v125 = vpop.f32.mrf.mxu0
    %v126 = vadd.f32 %v59, %v125
    %127 = vmatmul.f32.gmra.mxu0 %v84
    %v128 = vpop.f32.mrf.mxu0
    %v129 = vadd.f32 %v59, %v128
    %130 = vdwg.mxu0
    %131 = vst [vmem:[#allocation2] sm:$0xff] %v108
    %132 = vst [vmem:[#allocation2 + $0x8] sm:$0xff] %v111
    %133 = vst [vmem:[#allocation2 + $0x10] sm:$0xff] %v114
    %134 = vst [vmem:[#allocation2 + $0x18] sm:$0xff] %v117
    %135 = vst [vmem:[#allocation2 + $0x20] sm:$0xff] %v120
    %136 = vst [vmem:[#allocation2 + $0x28] sm:$0xff] %v123
    %137 = vst [vmem:[#allocation2 + $0x30] sm:$0xff] %v126
    %138 = vst [vmem:[#allocation2 + $0x38] sm:$0xff] %v129
    %v139 = vld [vmem:[%s2] sm:$0xff]
    %v140 = vld [vmem:[%s2 + $0x8] sm:$0xff]
    %v141 = vld [vmem:[%s2 + $0x10] sm:$0xff]
    %v142 = vld [vmem:[%s2 + $0x18] sm:$0xff]
    %v143 = vld [vmem:[%s4] sm:$0xff]
    %v144 = vld [vmem:[%s4 + $0x8] sm:$0xff]
    %v145 = vld [vmem:[%s4 + $0x10] sm:$0xff]
    %v146 = vld [vmem:[%s4 + $0x18] sm:$0xff]
    %v147 = vld [vmem:[%s5] sm:$0xff]
    %v148 = vld [vmem:[%s5 + $0x8] sm:$0xff]
    %v149 = vld [vmem:[%s5 + $0x10] sm:$0xff]
    %v150 = vld [vmem:[%s5 + $0x18] sm:$0xff]
    %v151 = vld [vmem:[%s6] sm:$0x1]
    %v152 = vld [vmem:[#allocation2] sm:$0xff]
    %vm153 = vcmask 261120
    %v155 = vsel %vm153, 0.0, 0
    %157 = vmatpush.msra.mxu0 0.0
    %158 = vmatpush.msra.mxu0 0.0
    %159 = vmatpush.msra.mxu0 0.0
    %160 = vmatpush.msra.mxu0 0.0
    %161 = vmatpush.msra.mxu0 0.0
    %162 = vmatpush.msra.mxu0 0.0
    %163 = vmatpush.msra.mxu0 0.0
    %164 = vmatpush.msra.mxu0 0.0
    %165 = vmatpush.msra.mxu0 0.0
    %166 = vmatpush.msra.mxu0 0.0
    %167 = vmatpush.msra.mxu0 0.0
    %168 = vmatpush.msra.mxu0 0.0
    %169 = vmatpush.msra.mxu0 %v142
    %170 = vmatpush.msra.mxu0 %v141
    %171 = vmatpush.msra.mxu0 %v140
    %172 = vmatpush.msra.mxu0 %v139
    %173 = vmatmul.f32.gmra.mxu0 %v155
    %v174 = vpop.f32.mrf.mxu0
    %v175 = vadd.f32 0.0, %v174
    %176 = vdwg.mxu0
    %v177 = vadd.f32 %v152, %v175
    %v178 = vxor.u32 %v177, 2147483648
    %v179 = vmul.f32 %v178, 1.442695
    %v180 = vpow.pop %v179
    %v181 = vadd.f32 %v180, 1.0
    %v182 = vrcp.pop %v181
    %v183 = vmul.f32 %v181, %v182
    %v184 = vsub.f32 1.0, %v183
    %v185 = vmul.f32 %v182, %v184
    %v186 = vadd.f32 %v182, %v185
    %vm187 = vweird.f32 %v181
    %vm188 = vweird.f32 %v182
    %vm189 = vmor %vm187, %vm188
    %v190 = vsel %vm189, %v182, %v186
    %v191 = vand.u32 2147483647, %v181
    %vm192 = vcmp.eq.f32.partialorder %v191, 8.507059e+37
    %v193 = vand.u32 %v181, 2147483648
    %v194 = vor.u32 1.1754944e-38, %v193
    %v195 = vsel %vm192, %v194, %v190
    %v196 = vmul.f32 1.0, %v195
    %v197 = vtanh.pop %v177
    %v198 = vmul.f32 %v196, 0.0
    %200 = vrot.lane.b32.xlu0 %v197, 64
    %v201 = vpop.permute.xlu0 %200
    %v203 = vmul.f32 %v196, %v201
    %205 = vrot.lane.b32.xlu0 %v203, 32
    %v206 = vpop.permute.xlu0 %205
    %v208 = vadd.f32 %v198, %v206
    %v209 = vtanh.pop %v208
    %211 = vrot.lane.b32.xlu0 %v209, 64
    %v212 = vpop.permute.xlu0 %211
    %v214 = vmul.f32 %v196, %v212
    %215 = vmatpush.msra.mxu0 0.0
    %216 = vmatpush.msra.mxu0 0.0
    %217 = vmatpush.msra.mxu0 0.0
    %218 = vmatpush.msra.mxu0 0.0
    %219 = vmatpush.msra.mxu0 0.0
    %220 = vmatpush.msra.mxu0 0.0
    %221 = vmatpush.msra.mxu0 0.0
    %222 = vmatpush.msra.mxu0 0.0
    %223 = vmatpush.msra.mxu0 0.0
    %224 = vmatpush.msra.mxu0 0.0
    %225 = vmatpush.msra.mxu0 0.0
    %226 = vmatpush.msra.mxu0 0.0
    %227 = vmatpush.msra.mxu0 %v150
    %228 = vmatpush.msra.mxu0 %v149
    %229 = vmatpush.msra.mxu0 %v148
    %230 = vmatpush.msra.mxu0 %v147
    %231 = vmatmul.f32.gmra.mxu0 %v155
    %v232 = vpop.f32.mrf.mxu0
    %v233 = vadd.f32 0.0, %v232
    %234 = vdwg.mxu0
    %236 = vrot.lane.b32.xlu0 %v214, 32
    %v237 = vpop.permute.xlu0 %236
    %v238 = vsel %vm153, %v237, 0
    %240 = vmatpush.msra.mxu0 0.0
    %241 = vmatpush.msra.mxu0 0.0
    %242 = vmatpush.msra.mxu0 0.0
    %243 = vmatpush.msra.mxu0 0.0
    %244 = vmatpush.msra.mxu0 0.0
    %245 = vmatpush.msra.mxu0 0.0
    %246 = vmatpush.msra.mxu0 0.0
    %247 = vmatpush.msra.mxu0 0.0
    %248 = vmatpush.msra.mxu0 0.0
    %249 = vmatpush.msra.mxu0 0.0
    %250 = vmatpush.msra.mxu0 0.0
    %251 = vmatpush.msra.mxu0 0.0
    %252 = vmatpush.msra.mxu0 %v146
    %253 = vmatpush.msra.mxu0 %v145
    %254 = vmatpush.msra.mxu0 %v144
    %255 = vmatpush.msra.mxu0 %v143
    %256 = vmatmul.f32.gmra.mxu0 %v238
    %v257 = vpop.f32.mrf.mxu0
    %v258 = vadd.f32 %v233, %v257
    %259 = vdwg.mxu0
    %v261 = vperm.slane %v151, 0
    %v263 = vadd.f32 %v258, %v261
    %v264 = vxor.u32 %v263, 2147483648
    %v265 = vmul.f32 %v264, 1.442695
    %v266 = vpow.pop %v265
    %v267 = vadd.f32 %v266, 1.0
    %v268 = vrcp.pop %v267
    %v269 = vmul.f32 %v267, %v268
    %v270 = vsub.f32 1.0, %v269
    %v271 = vmul.f32 %v268, %v270
    %v272 = vadd.f32 %v268, %v271
    %vm273 = vweird.f32 %v267
    %vm274 = vweird.f32 %v268
    %vm275 = vmor %vm273, %vm274
    %v276 = vsel %vm275, %v268, %v272
    %v277 = vand.u32 2147483647, %v267
    %vm278 = vcmp.eq.f32.partialorder %v277, 8.507059e+37
    %v279 = vand.u32 %v267, 2147483648
    %v280 = vor.u32 1.1754944e-38, %v279
    %v281 = vsel %vm278, %v280, %v276
    %v282 = vmul.f32 1.0, %v281
    %v283 = vtanh.pop %v263
    %v284 = vmul.f32 %v282, 0.0
    %286 = vrot.lane.b32.xlu0 %v283, 64
    %v287 = vpop.permute.xlu0 %286
    %v289 = vmul.f32 %v282, %v287
    %291 = vrot.lane.b32.xlu0 %v289, 32
    %v292 = vpop.permute.xlu0 %291
    %v294 = vadd.f32 %v284, %v292
    %v295 = vtanh.pop %v294
    %297 = vrot.lane.b32.xlu0 %v295, 64
    %v298 = vpop.permute.xlu0 %297
    %v300 = vmul.f32 %v282, %v298
    %302 = vrot.lane.b32.xlu0 %v300, 32
    %v303 = vpop.permute.xlu0 %302
    %vm305 = vcmask 261127
    %306 = vst.msk [vmem:[#allocation3 - $0x7] sm:$0x80] %vm305, %v303
    %s307 = scalar_lea.vmem [#allocation2], 8
    %v308 = vld [vmem:[%s307] sm:$0xff]
    %309 = vmatpush.msra.mxu0 0.0
    %310 = vmatpush.msra.mxu0 0.0
    %311 = vmatpush.msra.mxu0 0.0
    %312 = vmatpush.msra.mxu0 0.0
    %313 = vmatpush.msra.mxu0 0.0
    %314 = vmatpush.msra.mxu0 0.0
    %315 = vmatpush.msra.mxu0 0.0
    %316 = vmatpush.msra.mxu0 0.0
    %317 = vmatpush.msra.mxu0 0.0
    %318 = vmatpush.msra.mxu0 0.0
    %319 = vmatpush.msra.mxu0 0.0
    %320 = vmatpush.msra.mxu0 0.0
    %321 = vmatpush.msra.mxu0 %v142
    %322 = vmatpush.msra.mxu0 %v141
    %323 = vmatpush.msra.mxu0 %v140
    %324 = vmatpush.msra.mxu0 %v139
    %325 = vmatmul.f32.gmra.mxu0 %v238
    %v326 = vpop.f32.mrf.mxu0
    %v327 = vadd.f32 0.0, %v326
    %328 = vdwg.mxu0
    %v329 = vadd.f32 %v308, %v327
    %v330 = vxor.u32 %v329, 2147483648
    %v331 = vmul.f32 %v330, 1.442695
    %v332 = vpow.pop %v331
    %v333 = vadd.f32 %v332, 1.0
    %v334 = vrcp.pop %v333
    %v335 = vmul.f32 %v333, %v334
    %v336 = vsub.f32 1.0, %v335
    %v337 = vmul.f32 %v334, %v336
    %v338 = vadd.f32 %v334, %v337
    %vm339 = vweird.f32 %v333
    %vm340 = vweird.f32 %v334
    %vm341 = vmor %vm339, %vm340
    %v342 = vsel %vm341, %v334, %v338
    %v343 = vand.u32 2147483647, %v333
    %vm344 = vcmp.eq.f32.partialorder %v343, 8.507059e+37
    %v345 = vand.u32 %v333, 2147483648
    %v346 = vor.u32 1.1754944e-38, %v345
    %v347 = vsel %vm344, %v346, %v342
    %v348 = vmul.f32 1.0, %v347
    %v349 = vtanh.pop %v329
    %v350 = vmul.f32 %v348, %v208
    %352 = vrot.lane.b32.xlu0 %v349, 64
    %v353 = vpop.permute.xlu0 %352
    %v355 = vmul.f32 %v348, %v353
    %357 = vrot.lane.b32.xlu0 %v355, 32
    %v358 = vpop.permute.xlu0 %357
    %v360 = vadd.f32 %v350, %v358
    %v361 = vtanh.pop %v360
    %363 = vrot.lane.b32.xlu0 %v361, 64
    %v364 = vpop.permute.xlu0 %363
    %v366 = vmul.f32 %v348, %v364
    %v367 = vsel %vm153, %v303, 0
    %369 = vmatpush.msra.mxu0 0.0
    %370 = vmatpush.msra.mxu0 0.0
    %371 = vmatpush.msra.mxu0 0.0
    %372 = vmatpush.msra.mxu0 0.0
    %373 = vmatpush.msra.mxu0 0.0
    %374 = vmatpush.msra.mxu0 0.0
    %375 = vmatpush.msra.mxu0 0.0
    %376 = vmatpush.msra.mxu0 0.0
    %377 = vmatpush.msra.mxu0 0.0
    %378 = vmatpush.msra.mxu0 0.0
    %379 = vmatpush.msra.mxu0 0.0
    %380 = vmatpush.msra.mxu0 0.0
    %381 = vmatpush.msra.mxu0 %v150
    %382 = vmatpush.msra.mxu0 %v149
    %383 = vmatpush.msra.mxu0 %v148
    %384 = vmatpush.msra.mxu0 %v147
    %385 = vmatmul.f32.gmra.mxu0 %v367
    %v386 = vpop.f32.mrf.mxu0
    %v387 = vadd.f32 0.0, %v386
    %388 = vdwg.mxu0
    %390 = vrot.lane.b32.xlu0 %v366, 32
    %v391 = vpop.permute.xlu0 %390
    %v392 = vsel %vm153, %v391, 0
    %394 = vmatpush.msra.mxu0 0.0
    %395 = vmatpush.msra.mxu0 0.0
    %396 = vmatpush.msra.mxu0 0.0
    %397 = vmatpush.msra.mxu0 0.0
    %398 = vmatpush.msra.mxu0 0.0
    %399 = vmatpush.msra.mxu0 0.0
    %400 = vmatpush.msra.mxu0 0.0
    %401 = vmatpush.msra.mxu0 0.0
    %402 = vmatpush.msra.mxu0 0.0
    %403 = vmatpush.msra.mxu0 0.0
    %404 = vmatpush.msra.mxu0 0.0
    %405 = vmatpush.msra.mxu0 0.0
    %406 = vmatpush.msra.mxu0 %v146
    %407 = vmatpush.msra.mxu0 %v145
    %408 = vmatpush.msra.mxu0 %v144
    %409 = vmatpush.msra.mxu0 %v143
    %410 = vmatmul.f32.gmra.mxu0 %v392
    %v411 = vpop.f32.mrf.mxu0
    %v412 = vadd.f32 %v387, %v411
    %413 = vdwg.mxu0
    %v414 = vadd.f32 %v412, %v261
    %v415 = vxor.u32 %v414, 2147483648
    %v416 = vmul.f32 %v415, 1.442695
    %v417 = vpow.pop %v416
    %v418 = vadd.f32 %v417, 1.0
    %v419 = vrcp.pop %v418
    %v420 = vmul.f32 %v418, %v419
    %v421 = vsub.f32 1.0, %v420
    %v422 = vmul.f32 %v419, %v421
    %v423 = vadd.f32 %v419, %v422
    %vm424 = vweird.f32 %v418
    %vm425 = vweird.f32 %v419
    %vm426 = vmor %vm424, %vm425
    %v427 = vsel %vm426, %v419, %v423
    %v428 = vand.u32 2147483647, %v418
    %vm429 = vcmp.eq.f32.partialorder %v428, 8.507059e+37
    %v430 = vand.u32 %v418, 2147483648
    %v431 = vor.u32 1.1754944e-38, %v430
    %v432 = vsel %vm429, %v431, %v427
    %v433 = vmul.f32 1.0, %v432
    %v434 = vtanh.pop %v414
    %v435 = vmul.f32 %v433, %v294
    %437 = vrot.lane.b32.xlu0 %v434, 64
    %v438 = vpop.permute.xlu0 %437
    %v440 = vmul.f32 %v433, %v438
    %442 = vrot.lane.b32.xlu0 %v440, 32
    %v443 = vpop.permute.xlu0 %442
    %v445 = vadd.f32 %v435, %v443
    %v446 = vtanh.pop %v445
    %448 = vrot.lane.b32.xlu0 %v446, 64
    %v449 = vpop.permute.xlu0 %448
    %v451 = vmul.f32 %v433, %v449
    %453 = vrot.lane.b32.xlu0 %v451, 32
    %v454 = vpop.permute.xlu0 %453
    %456 = vst.msk [vmem:[#allocation3 - $0x6] sm:$0x80] %vm305, %v454
    %s457 = scalar_lea.vmem [#allocation2], 16
    %v458 = vld [vmem:[%s457] sm:$0xff]
    %459 = vmatpush.msra.mxu0 0.0
    %460 = vmatpush.msra.mxu0 0.0
    %461 = vmatpush.msra.mxu0 0.0
    %462 = vmatpush.msra.mxu0 0.0
    %463 = vmatpush.msra.mxu0 0.0
    %464 = vmatpush.msra.mxu0 0.0
    %465 = vmatpush.msra.mxu0 0.0
    %466 = vmatpush.msra.mxu0 0.0
    %467 = vmatpush.msra.mxu0 0.0
    %468 = vmatpush.msra.mxu0 0.0
    %469 = vmatpush.msra.mxu0 0.0
    %470 = vmatpush.msra.mxu0 0.0
    %471 = vmatpush.msra.mxu0 %v142
    %472 = vmatpush.msra.mxu0 %v141
    %473 = vmatpush.msra.mxu0 %v140
    %474 = vmatpush.msra.mxu0 %v139
    %475 = vmatmul.f32.gmra.mxu0 %v392
    %v476 = vpop.f32.mrf.mxu0
    %v477 = vadd.f32 0.0, %v476
    %478 = vdwg.mxu0
    %v479 = vadd.f32 %v458, %v477
    %v480 = vxor.u32 %v479, 2147483648
    %v481 = vmul.f32 %v480, 1.442695
    %v482 = vpow.pop %v481
    %v483 = vadd.f32 %v482, 1.0
    %v484 = vrcp.pop %v483
    %v485 = vmul.f32 %v483, %v484
    %v486 = vsub.f32 1.0, %v485
    %v487 = vmul.f32 %v484, %v486
    %v488 = vadd.f32 %v484, %v487
    %vm489 = vweird.f32 %v483
    %vm490 = vweird.f32 %v484
    %vm491 = vmor %vm489, %vm490
    %v492 = vsel %vm491, %v484, %v488
    %v493 = vand.u32 2147483647, %v483
    %vm494 = vcmp.eq.f32.partialorder %v493, 8.507059e+37
    %v495 = vand.u32 %v483, 2147483648
    %v496 = vor.u32 1.1754944e-38, %v495
    %v497 = vsel %vm494, %v496, %v492
    %v498 = vmul.f32 1.0, %v497
    %v499 = vtanh.pop %v479
    %v500 = vmul.f32 %v498, %v360
    %502 = vrot.lane.b32.xlu0 %v499, 64
    %v503 = vpop.permute.xlu0 %502
    %v505 = vmul.f32 %v498, %v503
    %507 = vrot.lane.b32.xlu0 %v505, 32
    %v508 = vpop.permute.xlu0 %507
    %v510 = vadd.f32 %v500, %v508
    %v511 = vtanh.pop %v510
    %513 = vrot.lane.b32.xlu0 %v511, 64
    %v514 = vpop.permute.xlu0 %513
    %v516 = vmul.f32 %v498, %v514
    %v517 = vsel %vm153, %v454, 0
    %519 = vmatpush.msra.mxu0 0.0
    %520 = vmatpush.msra.mxu0 0.0
    %521 = vmatpush.msra.mxu0 0.0
    %522 = vmatpush.msra.mxu0 0.0
    %523 = vmatpush.msra.mxu0 0.0
    %524 = vmatpush.msra.mxu0 0.0
    %525 = vmatpush.msra.mxu0 0.0
    %526 = vmatpush.msra.mxu0 0.0
    %527 = vmatpush.msra.mxu0 0.0
    %528 = vmatpush.msra.mxu0 0.0
    %529 = vmatpush.msra.mxu0 0.0
    %530 = vmatpush.msra.mxu0 0.0
    %531 = vmatpush.msra.mxu0 %v150
    %532 = vmatpush.msra.mxu0 %v149
    %533 = vmatpush.msra.mxu0 %v148
    %534 = vmatpush.msra.mxu0 %v147
    %535 = vmatmul.f32.gmra.mxu0 %v517
    %v536 = vpop.f32.mrf.mxu0
    %v537 = vadd.f32 0.0, %v536
    %538 = vdwg.mxu0
    %540 = vrot.lane.b32.xlu0 %v516, 32
    %v541 = vpop.permute.xlu0 %540
    %v542 = vsel %vm153, %v541, 0
    %544 = vmatpush.msra.mxu0 0.0
    %545 = vmatpush.msra.mxu0 0.0
    %546 = vmatpush.msra.mxu0 0.0
    %547 = vmatpush.msra.mxu0 0.0
    %548 = vmatpush.msra.mxu0 0.0
    %549 = vmatpush.msra.mxu0 0.0
    %550 = vmatpush.msra.mxu0 0.0
    %551 = vmatpush.msra.mxu0 0.0
    %552 = vmatpush.msra.mxu0 0.0
    %553 = vmatpush.msra.mxu0 0.0
    %554 = vmatpush.msra.mxu0 0.0
    %555 = vmatpush.msra.mxu0 0.0
    %556 = vmatpush.msra.mxu0 %v146
    %557 = vmatpush.msra.mxu0 %v145
    %558 = vmatpush.msra.mxu0 %v144
    %559 = vmatpush.msra.mxu0 %v143
    %560 = vmatmul.f32.gmra.mxu0 %v542
    %v561 = vpop.f32.mrf.mxu0
    %v562 = vadd.f32 %v537, %v561
    %563 = vdwg.mxu0
    %v564 = vadd.f32 %v562, %v261
    %v565 = vxor.u32 %v564, 2147483648
    %v566 = vmul.f32 %v565, 1.442695
    %v567 = vpow.pop %v566
    %v568 = vadd.f32 %v567, 1.0
    %v569 = vrcp.pop %v568
    %v570 = vmul.f32 %v568, %v569
    %v571 = vsub.f32 1.0, %v570
    %v572 = vmul.f32 %v569, %v571
    %v573 = vadd.f32 %v569, %v572
    %vm574 = vweird.f32 %v568
    %vm575 = vweird.f32 %v569
    %vm576 = vmor %vm574, %vm575
    %v577 = vsel %vm576, %v569, %v573
    %v578 = vand.u32 2147483647, %v568
    %vm579 = vcmp.eq.f32.partialorder %v578, 8.507059e+37
    %v580 = vand.u32 %v568, 2147483648
    %v581 = vor.u32 1.1754944e-38, %v580
    %v582 = vsel %vm579, %v581, %v577
    %v583 = vmul.f32 1.0, %v582
    %v584 = vtanh.pop %v564
    %v585 = vmul.f32 %v583, %v445
    %587 = vrot.lane.b32.xlu0 %v584, 64
    %v588 = vpop.permute.xlu0 %587
    %v590 = vmul.f32 %v583, %v588
    %592 = vrot.lane.b32.xlu0 %v590, 32
    %v593 = vpop.permute.xlu0 %592
    %v595 = vadd.f32 %v585, %v593
    %v596 = vtanh.pop %v595
    %598 = vrot.lane.b32.xlu0 %v596, 64
    %v599 = vpop.permute.xlu0 %598
    %v601 = vmul.f32 %v583, %v599
    %603 = vrot.lane.b32.xlu0 %v601, 32
    %v604 = vpop.permute.xlu0 %603
    %606 = vst.msk [vmem:[#allocation3 - $0x5] sm:$0x80] %vm305, %v604
    %s607 = scalar_lea.vmem [#allocation2], 24
    %v608 = vld [vmem:[%s607] sm:$0xff]
    %609 = vmatpush.msra.mxu0 0.0
    %610 = vmatpush.msra.mxu0 0.0
    %611 = vmatpush.msra.mxu0 0.0
    %612 = vmatpush.msra.mxu0 0.0
    %613 = vmatpush.msra.mxu0 0.0
    %614 = vmatpush.msra.mxu0 0.0
    %615 = vmatpush.msra.mxu0 0.0
    %616 = vmatpush.msra.mxu0 0.0
    %617 = vmatpush.msra.mxu0 0.0
    %618 = vmatpush.msra.mxu0 0.0
    %619 = vmatpush.msra.mxu0 0.0
    %620 = vmatpush.msra.mxu0 0.0
    %621 = vmatpush.msra.mxu0 %v142
    %622 = vmatpush.msra.mxu0 %v141
    %623 = vmatpush.msra.mxu0 %v140
    %624 = vmatpush.msra.mxu0 %v139
    %625 = vmatmul.f32.gmra.mxu0 %v542
    %v626 = vpop.f32.mrf.mxu0
    %v627 = vadd.f32 0.0, %v626
    %628 = vdwg.mxu0
    %v629 = vadd.f32 %v608, %v627
    %v630 = vxor.u32 %v629, 2147483648
    %v631 = vmul.f32 %v630, 1.442695
    %v632 = vpow.pop %v631
    %v633 = vadd.f32 %v632, 1.0
    %v634 = vrcp.pop %v633
    %v635 = vmul.f32 %v633, %v634
    %v636 = vsub.f32 1.0, %v635
    %v637 = vmul.f32 %v634, %v636
    %v638 = vadd.f32 %v634, %v637
    %vm639 = vweird.f32 %v633
    %vm640 = vweird.f32 %v634
    %vm641 = vmor %vm639, %vm640
    %v642 = vsel %vm641, %v634, %v638
    %v643 = vand.u32 2147483647, %v633
    %vm644 = vcmp.eq.f32.partialorder %v643, 8.507059e+37
    %v645 = vand.u32 %v633, 2147483648
    %v646 = vor.u32 1.1754944e-38, %v645
    %v647 = vsel %vm644, %v646, %v642
    %v648 = vmul.f32 1.0, %v647
    %v649 = vtanh.pop %v629
    %v650 = vmul.f32 %v648, %v510
    %652 = vrot.lane.b32.xlu0 %v649, 64
    %v653 = vpop.permute.xlu0 %652
    %v655 = vmul.f32 %v648, %v653
    %657 = vrot.lane.b32.xlu0 %v655, 32
    %v658 = vpop.permute.xlu0 %657
    %v660 = vadd.f32 %v650, %v658
    %v661 = vtanh.pop %v660
    %663 = vrot.lane.b32.xlu0 %v661, 64
    %v664 = vpop.permute.xlu0 %663
    %v666 = vmul.f32 %v648, %v664
    %v667 = vsel %vm153, %v604, 0
    %669 = vmatpush.msra.mxu0 0.0
    %670 = vmatpush.msra.mxu0 0.0
    %671 = vmatpush.msra.mxu0 0.0
    %672 = vmatpush.msra.mxu0 0.0
    %673 = vmatpush.msra.mxu0 0.0
    %674 = vmatpush.msra.mxu0 0.0
    %675 = vmatpush.msra.mxu0 0.0
    %676 = vmatpush.msra.mxu0 0.0
    %677 = vmatpush.msra.mxu0 0.0
    %678 = vmatpush.msra.mxu0 0.0
    %679 = vmatpush.msra.mxu0 0.0
    %680 = vmatpush.msra.mxu0 0.0
    %681 = vmatpush.msra.mxu0 %v150
    %682 = vmatpush.msra.mxu0 %v149
    %683 = vmatpush.msra.mxu0 %v148
    %684 = vmatpush.msra.mxu0 %v147
    %685 = vmatmul.f32.gmra.mxu0 %v667
    %v686 = vpop.f32.mrf.mxu0
    %v687 = vadd.f32 0.0, %v686
    %688 = vdwg.mxu0
    %690 = vrot.lane.b32.xlu0 %v666, 32
    %v691 = vpop.permute.xlu0 %690
    %v692 = vsel %vm153, %v691, 0
    %694 = vmatpush.msra.mxu0 0.0
    %695 = vmatpush.msra.mxu0 0.0
    %696 = vmatpush.msra.mxu0 0.0
    %697 = vmatpush.msra.mxu0 0.0
    %698 = vmatpush.msra.mxu0 0.0
    %699 = vmatpush.msra.mxu0 0.0
    %700 = vmatpush.msra.mxu0 0.0
    %701 = vmatpush.msra.mxu0 0.0
    %702 = vmatpush.msra.mxu0 0.0
    %703 = vmatpush.msra.mxu0 0.0
    %704 = vmatpush.msra.mxu0 0.0
    %705 = vmatpush.msra.mxu0 0.0
    %706 = vmatpush.msra.mxu0 %v146
    %707 = vmatpush.msra.mxu0 %v145
    %708 = vmatpush.msra.mxu0 %v144
    %709 = vmatpush.msra.mxu0 %v143
    %710 = vmatmul.f32.gmra.mxu0 %v692
    %v711 = vpop.f32.mrf.mxu0
    %v712 = vadd.f32 %v687, %v711
    %713 = vdwg.mxu0
    %v714 = vadd.f32 %v712, %v261
    %v715 = vxor.u32 %v714, 2147483648
    %v716 = vmul.f32 %v715, 1.442695
    %v717 = vpow.pop %v716
    %v718 = vadd.f32 %v717, 1.0
    %v719 = vrcp.pop %v718
    %v720 = vmul.f32 %v718, %v719
    %v721 = vsub.f32 1.0, %v720
    %v722 = vmul.f32 %v719, %v721
    %v723 = vadd.f32 %v719, %v722
    %vm724 = vweird.f32 %v718
    %vm725 = vweird.f32 %v719
    %vm726 = vmor %vm724, %vm725
    %v727 = vsel %vm726, %v719, %v723
    %v728 = vand.u32 2147483647, %v718
    %vm729 = vcmp.eq.f32.partialorder %v728, 8.507059e+37
    %v730 = vand.u32 %v718, 2147483648
    %v731 = vor.u32 1.1754944e-38, %v730
    %v732 = vsel %vm729, %v731, %v727
    %v733 = vmul.f32 1.0, %v732
    %v734 = vtanh.pop %v714
    %v735 = vmul.f32 %v733, %v595
    %737 = vrot.lane.b32.xlu0 %v734, 64
    %v738 = vpop.permute.xlu0 %737
    %v740 = vmul.f32 %v733, %v738
    %742 = vrot.lane.b32.xlu0 %v740, 32
    %v743 = vpop.permute.xlu0 %742
    %v745 = vadd.f32 %v735, %v743
    %v746 = vtanh.pop %v745
    %748 = vrot.lane.b32.xlu0 %v746, 64
    %v749 = vpop.permute.xlu0 %748
    %v751 = vmul.f32 %v733, %v749
    %753 = vrot.lane.b32.xlu0 %v751, 32
    %v754 = vpop.permute.xlu0 %753
    %756 = vst.msk [vmem:[#allocation3 - $0x4] sm:$0x80] %vm305, %v754
    %s757 = scalar_lea.vmem [#allocation2], 32
    %v758 = vld [vmem:[%s757] sm:$0xff]
    %759 = vmatpush.msra.mxu0 0.0
    %760 = vmatpush.msra.mxu0 0.0
    %761 = vmatpush.msra.mxu0 0.0
    %762 = vmatpush.msra.mxu0 0.0
    %763 = vmatpush.msra.mxu0 0.0
    %764 = vmatpush.msra.mxu0 0.0
    %765 = vmatpush.msra.mxu0 0.0
    %766 = vmatpush.msra.mxu0 0.0
    %767 = vmatpush.msra.mxu0 0.0
    %768 = vmatpush.msra.mxu0 0.0
    %769 = vmatpush.msra.mxu0 0.0
    %770 = vmatpush.msra.mxu0 0.0
    %771 = vmatpush.msra.mxu0 %v142
    %772 = vmatpush.msra.mxu0 %v141
    %773 = vmatpush.msra.mxu0 %v140
    %774 = vmatpush.msra.mxu0 %v139
    %775 = vmatmul.f32.gmra.mxu0 %v692
    %v776 = vpop.f32.mrf.mxu0
    %v777 = vadd.f32 0.0, %v776
    %778 = vdwg.mxu0
    %v779 = vadd.f32 %v758, %v777
    %v780 = vxor.u32 %v779, 2147483648
    %v781 = vmul.f32 %v780, 1.442695
    %v782 = vpow.pop %v781
    %v783 = vadd.f32 %v782, 1.0
    %v784 = vrcp.pop %v783
    %v785 = vmul.f32 %v783, %v784
    %v786 = vsub.f32 1.0, %v785
    %v787 = vmul.f32 %v784, %v786
    %v788 = vadd.f32 %v784, %v787
    %vm789 = vweird.f32 %v783
    %vm790 = vweird.f32 %v784
    %vm791 = vmor %vm789, %vm790
    %v792 = vsel %vm791, %v784, %v788
    %v793 = vand.u32 2147483647, %v783
    %vm794 = vcmp.eq.f32.partialorder %v793, 8.507059e+37
    %v795 = vand.u32 %v783, 2147483648
    %v796 = vor.u32 1.1754944e-38, %v795
    %v797 = vsel %vm794, %v796, %v792
    %v798 = vmul.f32 1.0, %v797
    %v799 = vtanh.pop %v779
    %v800 = vmul.f32 %v798, %v660
    %802 = vrot.lane.b32.xlu0 %v799, 64
    %v803 = vpop.permute.xlu0 %802
    %v805 = vmul.f32 %v798, %v803
    %807 = vrot.lane.b32.xlu0 %v805, 32
    %v808 = vpop.permute.xlu0 %807
    %v810 = vadd.f32 %v800, %v808
    %v811 = vtanh.pop %v810
    %813 = vrot.lane.b32.xlu0 %v811, 64
    %v814 = vpop.permute.xlu0 %813
    %v816 = vmul.f32 %v798, %v814
    %v817 = vsel %vm153, %v754, 0
    %819 = vmatpush.msra.mxu0 0.0
    %820 = vmatpush.msra.mxu0 0.0
    %821 = vmatpush.msra.mxu0 0.0
    %822 = vmatpush.msra.mxu0 0.0
    %823 = vmatpush.msra.mxu0 0.0
    %824 = vmatpush.msra.mxu0 0.0
    %825 = vmatpush.msra.mxu0 0.0
    %826 = vmatpush.msra.mxu0 0.0
    %827 = vmatpush.msra.mxu0 0.0
    %828 = vmatpush.msra.mxu0 0.0
    %829 = vmatpush.msra.mxu0 0.0
    %830 = vmatpush.msra.mxu0 0.0
    %831 = vmatpush.msra.mxu0 %v150
    %832 = vmatpush.msra.mxu0 %v149
    %833 = vmatpush.msra.mxu0 %v148
    %834 = vmatpush.msra.mxu0 %v147
    %835 = vmatmul.f32.gmra.mxu0 %v817
    %v836 = vpop.f32.mrf.mxu0
    %v837 = vadd.f32 0.0, %v836
    %838 = vdwg.mxu0
    %840 = vrot.lane.b32.xlu0 %v816, 32
    %v841 = vpop.permute.xlu0 %840
    %v842 = vsel %vm153, %v841, 0
    %844 = vmatpush.msra.mxu0 0.0
    %845 = vmatpush.msra.mxu0 0.0
    %846 = vmatpush.msra.mxu0 0.0
    %847 = vmatpush.msra.mxu0 0.0
    %848 = vmatpush.msra.mxu0 0.0
    %849 = vmatpush.msra.mxu0 0.0
    %850 = vmatpush.msra.mxu0 0.0
    %851 = vmatpush.msra.mxu0 0.0
    %852 = vmatpush.msra.mxu0 0.0
    %853 = vmatpush.msra.mxu0 0.0
    %854 = vmatpush.msra.mxu0 0.0
    %855 = vmatpush.msra.mxu0 0.0
    %856 = vmatpush.msra.mxu0 %v146
    %857 = vmatpush.msra.mxu0 %v145
    %858 = vmatpush.msra.mxu0 %v144
    %859 = vmatpush.msra.mxu0 %v143
    %860 = vmatmul.f32.gmra.mxu0 %v842
    %v861 = vpop.f32.mrf.mxu0
    %v862 = vadd.f32 %v837, %v861
    %863 = vdwg.mxu0
    %v864 = vadd.f32 %v862, %v261
    %v865 = vxor.u32 %v864, 2147483648
    %v866 = vmul.f32 %v865, 1.442695
    %v867 = vpow.pop %v866
    %v868 = vadd.f32 %v867, 1.0
    %v869 = vrcp.pop %v868
    %v870 = vmul.f32 %v868, %v869
    %v871 = vsub.f32 1.0, %v870
    %v872 = vmul.f32 %v869, %v871
    %v873 = vadd.f32 %v869, %v872
    %vm874 = vweird.f32 %v868
    %vm875 = vweird.f32 %v869
    %vm876 = vmor %vm874, %vm875
    %v877 = vsel %vm876, %v869, %v873
    %v878 = vand.u32 2147483647, %v868
    %vm879 = vcmp.eq.f32.partialorder %v878, 8.507059e+37
    %v880 = vand.u32 %v868, 2147483648
    %v881 = vor.u32 1.1754944e-38, %v880
    %v882 = vsel %vm879, %v881, %v877
    %v883 = vmul.f32 1.0, %v882
    %v884 = vtanh.pop %v864
    %v885 = vmul.f32 %v883, %v745
    %887 = vrot.lane.b32.xlu0 %v884, 64
    %v888 = vpop.permute.xlu0 %887
    %v890 = vmul.f32 %v883, %v888
    %892 = vrot.lane.b32.xlu0 %v890, 32
    %v893 = vpop.permute.xlu0 %892
    %v895 = vadd.f32 %v885, %v893
    %v896 = vtanh.pop %v895
    %898 = vrot.lane.b32.xlu0 %v896, 64
    %v899 = vpop.permute.xlu0 %898
    %v901 = vmul.f32 %v883, %v899
    %903 = vrot.lane.b32.xlu0 %v901, 32
    %v904 = vpop.permute.xlu0 %903
    %906 = vst.msk [vmem:[#allocation3 - $0x3] sm:$0x80] %vm305, %v904
    %s907 = scalar_lea.vmem [#allocation2], 40
    %v908 = vld [vmem:[%s907] sm:$0xff]
    %909 = vmatpush.msra.mxu0 0.0
    %910 = vmatpush.msra.mxu0 0.0
    %911 = vmatpush.msra.mxu0 0.0
    %912 = vmatpush.msra.mxu0 0.0
    %913 = vmatpush.msra.mxu0 0.0
    %914 = vmatpush.msra.mxu0 0.0
    %915 = vmatpush.msra.mxu0 0.0
    %916 = vmatpush.msra.mxu0 0.0
    %917 = vmatpush.msra.mxu0 0.0
    %918 = vmatpush.msra.mxu0 0.0
    %919 = vmatpush.msra.mxu0 0.0
    %920 = vmatpush.msra.mxu0 0.0
    %921 = vmatpush.msra.mxu0 %v142
    %922 = vmatpush.msra.mxu0 %v141
    %923 = vmatpush.msra.mxu0 %v140
    %924 = vmatpush.msra.mxu0 %v139
    %925 = vmatmul.f32.gmra.mxu0 %v842
    %v926 = vpop.f32.mrf.mxu0
    %v927 = vadd.f32 0.0, %v926
    %928 = vdwg.mxu0
    %v929 = vadd.f32 %v908, %v927
    %v930 = vxor.u32 %v929, 2147483648
    %v931 = vmul.f32 %v930, 1.442695
    %v932 = vpow.pop %v931
    %v933 = vadd.f32 %v932, 1.0
    %v934 = vrcp.pop %v933
    %v935 = vmul.f32 %v933, %v934
    %v936 = vsub.f32 1.0, %v935
    %v937 = vmul.f32 %v934, %v936
    %v938 = vadd.f32 %v934, %v937
    %vm939 = vweird.f32 %v933
    %vm940 = vweird.f32 %v934
    %vm941 = vmor %vm939, %vm940
    %v942 = vsel %vm941, %v934, %v938
    %v943 = vand.u32 2147483647, %v933
    %vm944 = vcmp.eq.f32.partialorder %v943, 8.507059e+37
    %v945 = vand.u32 %v933, 2147483648
    %v946 = vor.u32 1.1754944e-38, %v945
    %v947 = vsel %vm944, %v946, %v942
    %v948 = vmul.f32 1.0, %v947
    %v949 = vtanh.pop %v929
    %v950 = vmul.f32 %v948, %v810
    %952 = vrot.lane.b32.xlu0 %v949, 64
    %v953 = vpop.permute.xlu0 %952
    %v955 = vmul.f32 %v948, %v953
    %957 = vrot.lane.b32.xlu0 %v955, 32
    %v958 = vpop.permute.xlu0 %957
    %v960 = vadd.f32 %v950, %v958
    %v961 = vtanh.pop %v960
    %963 = vrot.lane.b32.xlu0 %v961, 64
    %v964 = vpop.permute.xlu0 %963
    %v966 = vmul.f32 %v948, %v964
    %v967 = vsel %vm153, %v904, 0
    %969 = vmatpush.msra.mxu0 0.0
    %970 = vmatpush.msra.mxu0 0.0
    %971 = vmatpush.msra.mxu0 0.0
    %972 = vmatpush.msra.mxu0 0.0
    %973 = vmatpush.msra.mxu0 0.0
    %974 = vmatpush.msra.mxu0 0.0
    %975 = vmatpush.msra.mxu0 0.0
    %976 = vmatpush.msra.mxu0 0.0
    %977 = vmatpush.msra.mxu0 0.0
    %978 = vmatpush.msra.mxu0 0.0
    %979 = vmatpush.msra.mxu0 0.0
    %980 = vmatpush.msra.mxu0 0.0
    %981 = vmatpush.msra.mxu0 %v150
    %982 = vmatpush.msra.mxu0 %v149
    %983 = vmatpush.msra.mxu0 %v148
    %984 = vmatpush.msra.mxu0 %v147
    %985 = vmatmul.f32.gmra.mxu0 %v967
    %v986 = vpop.f32.mrf.mxu0
    %v987 = vadd.f32 0.0, %v986
    %988 = vdwg.mxu0
    %990 = vrot.lane.b32.xlu0 %v966, 32
    %v991 = vpop.permute.xlu0 %990
    %v992 = vsel %vm153, %v991, 0
    %994 = vmatpush.msra.mxu0 0.0
    %995 = vmatpush.msra.mxu0 0.0
    %996 = vmatpush.msra.mxu0 0.0
    %997 = vmatpush.msra.mxu0 0.0
    %998 = vmatpush.msra.mxu0 0.0
    %999 = vmatpush.msra.mxu0 0.0
    %1000 = vmatpush.msra.mxu0 0.0
    %1001 = vmatpush.msra.mxu0 0.0
    %1002 = vmatpush.msra.mxu0 0.0
    %1003 = vmatpush.msra.mxu0 0.0
    %1004 = vmatpush.msra.mxu0 0.0
    %1005 = vmatpush.msra.mxu0 0.0
    %1006 = vmatpush.msra.mxu0 %v146
    %1007 = vmatpush.msra.mxu0 %v145
    %1008 = vmatpush.msra.mxu0 %v144
    %1009 = vmatpush.msra.mxu0 %v143
    %1010 = vmatmul.f32.gmra.mxu0 %v992
    %v1011 = vpop.f32.mrf.mxu0
    %v1012 = vadd.f32 %v987, %v1011
    %1013 = vdwg.mxu0
    %v1014 = vadd.f32 %v1012, %v261
    %v1015 = vxor.u32 %v1014, 2147483648
    %v1016 = vmul.f32 %v1015, 1.442695
    %v1017 = vpow.pop %v1016
    %v1018 = vadd.f32 %v1017, 1.0
    %v1019 = vrcp.pop %v1018
    %v1020 = vmul.f32 %v1018, %v1019
    %v1021 = vsub.f32 1.0, %v1020
    %v1022 = vmul.f32 %v1019, %v1021
    %v1023 = vadd.f32 %v1019, %v1022
    %vm1024 = vweird.f32 %v1018
    %vm1025 = vweird.f32 %v1019
    %vm1026 = vmor %vm1024, %vm1025
    %v1027 = vsel %vm1026, %v1019, %v1023
    %v1028 = vand.u32 2147483647, %v1018
    %vm1029 = vcmp.eq.f32.partialorder %v1028, 8.507059e+37
    %v1030 = vand.u32 %v1018, 2147483648
    %v1031 = vor.u32 1.1754944e-38, %v1030
    %v1032 = vsel %vm1029, %v1031, %v1027
    %v1033 = vmul.f32 1.0, %v1032
    %v1034 = vtanh.pop %v1014
    %v1035 = vmul.f32 %v1033, %v895
    %1037 = vrot.lane.b32.xlu0 %v1034, 64
    %v1038 = vpop.permute.xlu0 %1037
    %v1040 = vmul.f32 %v1033, %v1038
    %1042 = vrot.lane.b32.xlu0 %v1040, 32
    %v1043 = vpop.permute.xlu0 %1042
    %v1045 = vadd.f32 %v1035, %v1043
    %v1046 = vtanh.pop %v1045
    %1048 = vrot.lane.b32.xlu0 %v1046, 64
    %v1049 = vpop.permute.xlu0 %1048
    %v1051 = vmul.f32 %v1033, %v1049
    %1053 = vrot.lane.b32.xlu0 %v1051, 32
    %v1054 = vpop.permute.xlu0 %1053
    %1056 = vst.msk [vmem:[#allocation3 - $0x2] sm:$0x80] %vm305, %v1054
    %s1057 = scalar_lea.vmem [#allocation2], 48
    %v1058 = vld [vmem:[%s1057] sm:$0xff]
    %1059 = vmatpush.msra.mxu0 0.0
    %1060 = vmatpush.msra.mxu0 0.0
    %1061 = vmatpush.msra.mxu0 0.0
    %1062 = vmatpush.msra.mxu0 0.0
    %1063 = vmatpush.msra.mxu0 0.0
    %1064 = vmatpush.msra.mxu0 0.0
    %1065 = vmatpush.msra.mxu0 0.0
    %1066 = vmatpush.msra.mxu0 0.0
    %1067 = vmatpush.msra.mxu0 0.0
    %1068 = vmatpush.msra.mxu0 0.0
    %1069 = vmatpush.msra.mxu0 0.0
    %1070 = vmatpush.msra.mxu0 0.0
    %1071 = vmatpush.msra.mxu0 %v142
    %1072 = vmatpush.msra.mxu0 %v141
    %1073 = vmatpush.msra.mxu0 %v140
    %1074 = vmatpush.msra.mxu0 %v139
    %1075 = vmatmul.f32.gmra.mxu0 %v992
    %v1076 = vpop.f32.mrf.mxu0
    %v1077 = vadd.f32 0.0, %v1076
    %1078 = vdwg.mxu0
    %v1079 = vadd.f32 %v1058, %v1077
    %v1080 = vxor.u32 %v1079, 2147483648
    %v1081 = vmul.f32 %v1080, 1.442695
    %v1082 = vpow.pop %v1081
    %v1083 = vadd.f32 %v1082, 1.0
    %v1084 = vrcp.pop %v1083
    %v1085 = vmul.f32 %v1083, %v1084
    %v1086 = vsub.f32 1.0, %v1085
    %v1087 = vmul.f32 %v1084, %v1086
    %v1088 = vadd.f32 %v1084, %v1087
    %vm1089 = vweird.f32 %v1083
    %vm1090 = vweird.f32 %v1084
    %vm1091 = vmor %vm1089, %vm1090
    %v1092 = vsel %vm1091, %v1084, %v1088
    %v1093 = vand.u32 2147483647, %v1083
    %vm1094 = vcmp.eq.f32.partialorder %v1093, 8.507059e+37
    %v1095 = vand.u32 %v1083, 2147483648
    %v1096 = vor.u32 1.1754944e-38, %v1095
    %v1097 = vsel %vm1094, %v1096, %v1092
    %v1098 = vmul.f32 1.0, %v1097
    %v1099 = vtanh.pop %v1079
    %v1100 = vmul.f32 %v1098, %v960
    %1102 = vrot.lane.b32.xlu0 %v1099, 64
    %v1103 = vpop.permute.xlu0 %1102
    %v1105 = vmul.f32 %v1098, %v1103
    %1107 = vrot.lane.b32.xlu0 %v1105, 32
    %v1108 = vpop.permute.xlu0 %1107
    %v1110 = vadd.f32 %v1100, %v1108
    %v1111 = vtanh.pop %v1110
    %1113 = vrot.lane.b32.xlu0 %v1111, 64
    %v1114 = vpop.permute.xlu0 %1113
    %v1116 = vmul.f32 %v1098, %v1114
    %v1117 = vsel %vm153, %v1054, 0
    %1119 = vmatpush.msra.mxu0 0.0
    %1120 = vmatpush.msra.mxu0 0.0
    %1121 = vmatpush.msra.mxu0 0.0
    %1122 = vmatpush.msra.mxu0 0.0
    %1123 = vmatpush.msra.mxu0 0.0
    %1124 = vmatpush.msra.mxu0 0.0
    %1125 = vmatpush.msra.mxu0 0.0
    %1126 = vmatpush.msra.mxu0 0.0
    %1127 = vmatpush.msra.mxu0 0.0
    %1128 = vmatpush.msra.mxu0 0.0
    %1129 = vmatpush.msra.mxu0 0.0
    %1130 = vmatpush.msra.mxu0 0.0
    %1131 = vmatpush.msra.mxu0 %v150
    %1132 = vmatpush.msra.mxu0 %v149
    %1133 = vmatpush.msra.mxu0 %v148
    %1134 = vmatpush.msra.mxu0 %v147
    %1135 = vmatmul.f32.gmra.mxu0 %v1117
    %v1136 = vpop.f32.mrf.mxu0
    %v1137 = vadd.f32 0.0, %v1136
    %1138 = vdwg.mxu0
    %1140 = vrot.lane.b32.xlu0 %v1116, 32
    %v1141 = vpop.permute.xlu0 %1140
    %v1142 = vsel %vm153, %v1141, 0
    %1144 = vmatpush.msra.mxu0 0.0
    %1145 = vmatpush.msra.mxu0 0.0
    %1146 = vmatpush.msra.mxu0 0.0
    %1147 = vmatpush.msra.mxu0 0.0
    %1148 = vmatpush.msra.mxu0 0.0
    %1149 = vmatpush.msra.mxu0 0.0
    %1150 = vmatpush.msra.mxu0 0.0
    %1151 = vmatpush.msra.mxu0 0.0
    %1152 = vmatpush.msra.mxu0 0.0
    %1153 = vmatpush.msra.mxu0 0.0
    %1154 = vmatpush.msra.mxu0 0.0
    %1155 = vmatpush.msra.mxu0 0.0
    %1156 = vmatpush.msra.mxu0 %v146
    %1157 = vmatpush.msra.mxu0 %v145
    %1158 = vmatpush.msra.mxu0 %v144
    %1159 = vmatpush.msra.mxu0 %v143
    %1160 = vmatmul.f32.gmra.mxu0 %v1142
    %v1161 = vpop.f32.mrf.mxu0
    %v1162 = vadd.f32 %v1137, %v1161
    %1163 = vdwg.mxu0
    %v1164 = vadd.f32 %v1162, %v261
    %v1165 = vxor.u32 %v1164, 2147483648
    %v1166 = vmul.f32 %v1165, 1.442695
    %v1167 = vpow.pop %v1166
    %v1168 = vadd.f32 %v1167, 1.0
    %v1169 = vrcp.pop %v1168
    %v1170 = vmul.f32 %v1168, %v1169
    %v1171 = vsub.f32 1.0, %v1170
    %v1172 = vmul.f32 %v1169, %v1171
    %v1173 = vadd.f32 %v1169, %v1172
    %vm1174 = vweird.f32 %v1168
    %vm1175 = vweird.f32 %v1169
    %vm1176 = vmor %vm1174, %vm1175
    %v1177 = vsel %vm1176, %v1169, %v1173
    %v1178 = vand.u32 2147483647, %v1168
    %vm1179 = vcmp.eq.f32.partialorder %v1178, 8.507059e+37
    %v1180 = vand.u32 %v1168, 2147483648
    %v1181 = vor.u32 1.1754944e-38, %v1180
    %v1182 = vsel %vm1179, %v1181, %v1177
    %v1183 = vmul.f32 1.0, %v1182
    %v1184 = vtanh.pop %v1164
    %v1185 = vmul.f32 %v1183, %v1045
    %1187 = vrot.lane.b32.xlu0 %v1184, 64
    %v1188 = vpop.permute.xlu0 %1187
    %v1190 = vmul.f32 %v1183, %v1188
    %1192 = vrot.lane.b32.xlu0 %v1190, 32
    %v1193 = vpop.permute.xlu0 %1192
    %v1195 = vadd.f32 %v1185, %v1193
    %v1196 = vtanh.pop %v1195
    %1198 = vrot.lane.b32.xlu0 %v1196, 64
    %v1199 = vpop.permute.xlu0 %1198
    %v1201 = vmul.f32 %v1183, %v1199
    %1203 = vrot.lane.b32.xlu0 %v1201, 32
    %v1204 = vpop.permute.xlu0 %1203
    %1206 = vst.msk [vmem:[#allocation3 - $0x1] sm:$0x80] %vm305, %v1204
    %s1207 = scalar_lea.vmem [#allocation2], 56
    %v1208 = vld [vmem:[%s1207] sm:$0xff]
    %1209 = vmatpush.msra.mxu0 0.0
    %1210 = vmatpush.msra.mxu0 0.0
    %1211 = vmatpush.msra.mxu0 0.0
    %1212 = vmatpush.msra.mxu0 0.0
    %1213 = vmatpush.msra.mxu0 0.0
    %1214 = vmatpush.msra.mxu0 0.0
    %1215 = vmatpush.msra.mxu0 0.0
    %1216 = vmatpush.msra.mxu0 0.0
    %1217 = vmatpush.msra.mxu0 0.0
    %1218 = vmatpush.msra.mxu0 0.0
    %1219 = vmatpush.msra.mxu0 0.0
    %1220 = vmatpush.msra.mxu0 0.0
    %1221 = vmatpush.msra.mxu0 %v142
    %1222 = vmatpush.msra.mxu0 %v141
    %1223 = vmatpush.msra.mxu0 %v140
    %1224 = vmatpush.msra.mxu0 %v139
    %1225 = vmatmul.f32.gmra.mxu0 %v1142
    %v1226 = vpop.f32.mrf.mxu0
    %v1227 = vadd.f32 0.0, %v1226
    %1228 = vdwg.mxu0
    %v1229 = vadd.f32 %v1208, %v1227
    %v1230 = vxor.u32 %v1229, 2147483648
    %v1231 = vmul.f32 %v1230, 1.442695
    %v1232 = vpow.pop %v1231
    %v1233 = vadd.f32 %v1232, 1.0
    %v1234 = vrcp.pop %v1233
    %v1235 = vmul.f32 %v1233, %v1234
    %v1236 = vsub.f32 1.0, %v1235
    %v1237 = vmul.f32 %v1234, %v1236
    %v1238 = vadd.f32 %v1234, %v1237
    %vm1239 = vweird.f32 %v1233
    %vm1240 = vweird.f32 %v1234
    %vm1241 = vmor %vm1239, %vm1240
    %v1242 = vsel %vm1241, %v1234, %v1238
    %v1243 = vand.u32 2147483647, %v1233
    %vm1244 = vcmp.eq.f32.partialorder %v1243, 8.507059e+37
    %v1245 = vand.u32 %v1233, 2147483648
    %v1246 = vor.u32 1.1754944e-38, %v1245
    %v1247 = vsel %vm1244, %v1246, %v1242
    %v1248 = vmul.f32 1.0, %v1247
    %v1249 = vtanh.pop %v1229
    %v1250 = vmul.f32 %v1248, %v1110
    %1252 = vrot.lane.b32.xlu0 %v1249, 64
    %v1253 = vpop.permute.xlu0 %1252
    %v1255 = vmul.f32 %v1248, %v1253
    %1257 = vrot.lane.b32.xlu0 %v1255, 32
    %v1258 = vpop.permute.xlu0 %1257
    %v1260 = vadd.f32 %v1250, %v1258
    %v1261 = vtanh.pop %v1260
    %1263 = vrot.lane.b32.xlu0 %v1261, 64
    %v1264 = vpop.permute.xlu0 %1263
    %v1266 = vmul.f32 %v1248, %v1264
    %v1267 = vsel %vm153, %v1204, 0
    %1269 = vmatpush.msra.mxu0 0.0
    %1270 = vmatpush.msra.mxu0 0.0
    %1271 = vmatpush.msra.mxu0 0.0
    %1272 = vmatpush.msra.mxu0 0.0
    %1273 = vmatpush.msra.mxu0 0.0
    %1274 = vmatpush.msra.mxu0 0.0
    %1275 = vmatpush.msra.mxu0 0.0
    %1276 = vmatpush.msra.mxu0 0.0
    %1277 = vmatpush.msra.mxu0 0.0
    %1278 = vmatpush.msra.mxu0 0.0
    %1279 = vmatpush.msra.mxu0 0.0
    %1280 = vmatpush.msra.mxu0 0.0
    %1281 = vmatpush.msra.mxu0 %v150
    %1282 = vmatpush.msra.mxu0 %v149
    %1283 = vmatpush.msra.mxu0 %v148
    %1284 = vmatpush.msra.mxu0 %v147
    %1285 = vmatmul.f32.gmra.mxu0 %v1267
    %v1286 = vpop.f32.mrf.mxu0
    %v1287 = vadd.f32 0.0, %v1286
    %1288 = vdwg.mxu0
    %1290 = vrot.lane.b32.xlu0 %v1266, 32
    %v1291 = vpop.permute.xlu0 %1290
    %v1292 = vsel %vm153, %v1291, 0
    %1294 = vmatpush.msra.mxu0 0.0
    %1295 = vmatpush.msra.mxu0 0.0
    %1296 = vmatpush.msra.mxu0 0.0
    %1297 = vmatpush.msra.mxu0 0.0
    %1298 = vmatpush.msra.mxu0 0.0
    %1299 = vmatpush.msra.mxu0 0.0
    %1300 = vmatpush.msra.mxu0 0.0
    %1301 = vmatpush.msra.mxu0 0.0
    %1302 = vmatpush.msra.mxu0 0.0
    %1303 = vmatpush.msra.mxu0 0.0
    %1304 = vmatpush.msra.mxu0 0.0
    %1305 = vmatpush.msra.mxu0 0.0
    %1306 = vmatpush.msra.mxu0 %v146
    %1307 = vmatpush.msra.mxu0 %v145
    %1308 = vmatpush.msra.mxu0 %v144
    %1309 = vmatpush.msra.mxu0 %v143
    %1310 = vmatmul.f32.gmra.mxu0 %v1292
    %v1311 = vpop.f32.mrf.mxu0
    %v1312 = vadd.f32 %v1287, %v1311
    %1313 = vdwg.mxu0
    %v1314 = vadd.f32 %v1312, %v261
    %v1315 = vxor.u32 %v1314, 2147483648
    %v1316 = vmul.f32 %v1315, 1.442695
    %v1317 = vpow.pop %v1316
    %v1318 = vadd.f32 %v1317, 1.0
    %v1319 = vrcp.pop %v1318
    %v1320 = vmul.f32 %v1318, %v1319
    %v1321 = vsub.f32 1.0, %v1320
    %v1322 = vmul.f32 %v1319, %v1321
    %v1323 = vadd.f32 %v1319, %v1322
    %vm1324 = vweird.f32 %v1318
    %vm1325 = vweird.f32 %v1319
    %vm1326 = vmor %vm1324, %vm1325
    %v1327 = vsel %vm1326, %v1319, %v1323
    %v1328 = vand.u32 2147483647, %v1318
    %vm1329 = vcmp.eq.f32.partialorder %v1328, 8.507059e+37
    %v1330 = vand.u32 %v1318, 2147483648
    %v1331 = vor.u32 1.1754944e-38, %v1330
    %v1332 = vsel %vm1329, %v1331, %v1327
    %v1333 = vmul.f32 1.0, %v1332
    %v1334 = vtanh.pop %v1314
    %v1335 = vmul.f32 %v1333, %v1195
    %1337 = vrot.lane.b32.xlu0 %v1334, 64
    %v1338 = vpop.permute.xlu0 %1337
    %v1340 = vmul.f32 %v1333, %v1338
    %1342 = vrot.lane.b32.xlu0 %v1340, 32
    %v1343 = vpop.permute.xlu0 %1342
    %v1345 = vadd.f32 %v1335, %v1343
    %v1346 = vtanh.pop %v1345
    %1348 = vrot.lane.b32.xlu0 %v1346, 64
    %v1349 = vpop.permute.xlu0 %1348
    %v1351 = vmul.f32 %v1333, %v1349
    %1353 = vrot.lane.b32.xlu0 %v1351, 32
    %v1354 = vpop.permute.xlu0 %1353
    %1356 = vst.msk [vmem:[#allocation3] sm:$0x80] %vm305, %v1354
    %v1357 = vld [vmem:[#allocation3] sm:$0xff]
    %v1358 = vld [vmem:[%s7] sm:$0xff]
    %v1359 = vld [vmem:[%s7 + $0x8] sm:$0xff]
    %v1360 = vld [vmem:[%s7 + $0x10] sm:$0xff]
    %v1361 = vld [vmem:[%s7 + $0x18] sm:$0xff]
    %v1362 = vld [vmem:[#allocation4] sm:$0x1]
    %v1364 = vperm.slane %v1362, 0
    %v1367 = vsel %vm153, %v1357, 0
    %1369 = vmatpush.msra.mxu0 0.0
    %1370 = vmatpush.msra.mxu0 0.0
    %1371 = vmatpush.msra.mxu0 0.0
    %1372 = vmatpush.msra.mxu0 0.0
    %1373 = vmatpush.msra.mxu0 0.0
    %1374 = vmatpush.msra.mxu0 0.0
    %1375 = vmatpush.msra.mxu0 0.0
    %1376 = vmatpush.msra.mxu0 0.0
    %1377 = vmatpush.msra.mxu0 0.0
    %1378 = vmatpush.msra.mxu0 0.0
    %1379 = vmatpush.msra.mxu0 0.0
    %1380 = vmatpush.msra.mxu0 0.0
    %1381 = vmatpush.msra.mxu0 %v1361
    %1382 = vmatpush.msra.mxu0 %v1360
    %1383 = vmatpush.msra.mxu0 %v1359
    %1384 = vmatpush.msra.mxu0 %v1358
    %1385 = vmatmul.f32.gmra.mxu0 %v1367
    %v1386 = vpop.f32.mrf.mxu0
    %v1387 = vadd.f32 %v1364, %v1386
    %1388 = vdwg.mxu0
    %vm1389 = vcmask 7168
    %1390 = vst.msk [vmem:[%s9] sm:$0xff] %vm1389, %v1387
    // Predicated region
    $region42: #{tpu_custom_call.1} parent=1 // pred_check
      _
    $region43: #{tpu_custom_call.1} parent=1 // pred_check_branch
      %1392 = sbr.rel (0) target = $region45
    $region44: #{tpu_custom_call.1} parent=1 // pred_region
      _
    $region45: #{tpu_custom_call.1} parent=1 // pred_fallthru
      _
    // Predicated region
    $region46: #{tpu_custom_call.1} parent=1 // pred_check
      _
    $region47: #{tpu_custom_call.1} parent=1 // pred_check_branch
      %1394 = sbr.rel (0) target = $region49
    $region48: #{tpu_custom_call.1} parent=1 // pred_region
      _
    $region49: #{tpu_custom_call.1} parent=1 // pred_fallthru
      _
    %1395 = vsyncpa [#allocation6], 1

</llo_original>
